<compile_context>
chip_gen: v6e
topology: v6e:2x2x1
jax: 0.10.0
libtpu: 0.0.40
codegen_flags: <defaults>
</compile_context>

<pallas_src>
import functools

import jax
import jax.numpy as jnp
from jax.experimental import pallas as pl
from jax.experimental.pallas import tpu as pltpu

LATENT_SIZE = 8
HIDDEN = 64
DIN = LATENT_SIZE + 2          # 10 input features (latent | x, y)
DIN_PAD = 16                   # sublane-aligned input feature rows
H2 = HIDDEN - DIN              # 54 = layer-2 output width


def sdf_mlp_kernel(x_ref, wx_ref, wh_ref, aux_ref, out_ref):
    """One batch tile: x_ref (DIN_PAD, TM) f32 -> out_ref (1, TM) f32."""
    x = x_ref[...]                               # (16, TM) f32
    xb = x.astype(jnp.bfloat16)

    def mm(w, hb):                               # bf16 MXU matmul, f32 accum
        return jnp.dot(w, hb, preferred_element_type=jnp.float32)

    def bias(l):                                 # (64, 1) f32, lane-broadcast
        return aux_ref[:, l:l + 1]

    relu = lambda v: jnp.maximum(v, 0.0)
    bf16 = lambda v: v.astype(jnp.bfloat16)

    # layer 0: (latent+2) -> 64   (padded K rows of x / cols of w are zero)
    h = relu(mm(wx_ref[0], xb) + bias(0))
    # layer 1: 64 -> 64
    h = relu(mm(wh_ref[0], bf16(h)) + bias(1))
    # layer 2: 64 -> 54 (weight/bias rows 54..63 are zero-padded, so the extra
    # output rows are exactly 0 after ReLU)
    h = relu(mm(wh_ref[1], bf16(h)) + bias(2))
    # layer 3: input is concat([h, input]); implemented as two MXU dots summed
    # into one f32 accumulation chain (w3a's padded columns 54..63 are zero).
    h = relu(mm(wh_ref[2], bf16(h)) + mm(wx_ref[1], xb) + bias(3))
    # layers 4, 5: 64 -> 64
    h = relu(mm(wh_ref[3], bf16(h)) + bias(4))
    h = relu(mm(wh_ref[4], bf16(h)) + bias(5))
    # final 64 -> 1: VPU multiply + sublane reduce, lane-dense (1, TM) store
    wout = aux_ref[:, 7:8]                       # (64, 1) f32
    b_out = aux_ref[0:1, 6:7]                    # (1, 1)  f32
    out_ref[...] = jnp.sum(wout * h, axis=0, keepdims=True) + b_out


def init_params(key, latent_size=LATENT_SIZE, hidden=HIDDEN):
    """Torch-equivalent init; weights kept in torch (out, in) orientation.

    torch Linear init ~ U(-1/sqrt(fan_in), 1/sqrt(fan_in)); weight_norm(dim=0)
    with g initialized to ||v|| is an identity reparameterization at init, so
    the effective forward weights are just the Linear weights.
    """
    din = latent_size + 2
    fan_ins = [din, hidden, hidden, hidden, hidden, hidden, hidden]
    fan_outs = [hidden, hidden, hidden - din, hidden, hidden, hidden, 1]
    weights, biases = [], []
    for fi, fo in zip(fan_ins, fan_outs):
        key, kw, kb = jax.random.split(key, 3)
        bound = 1.0 / (fi ** 0.5)
        weights.append(jax.random.uniform(kw, (fo, fi), jnp.float32, -bound, bound))
        biases.append(jax.random.uniform(kb, (fo,), jnp.float32, -bound, bound))
    return weights, biases


def pack_params(weights, biases):
    """Pack the 7 layers into 3 kernel operands (bf16 matmul weights)."""
    w0, w1, w2, w3, w4, w5, w6 = weights
    b0, b1, b2, b3, b4, b5, b6 = biases

    # weights that contract against the padded raw input (K = DIN_PAD)
    wx = jnp.zeros((2, HIDDEN, DIN_PAD), jnp.float32)
    wx = wx.at[0, :, :DIN].set(w0)             # layer 0
    wx = wx.at[1, :, :DIN].set(w3[:, H2:])     # x-half of layer 3

    # hidden (K = 64) weights: layers 1, 2 (out-padded), 3a (in-padded), 4, 5
    wh = jnp.zeros((5, HIDDEN, HIDDEN), jnp.float32)
    wh = wh.at[0].set(w1)
    wh = wh.at[1, :H2, :].set(w2)
    wh = wh.at[2, :, :H2].set(w3[:, :H2])      # h-half of layer 3
    wh = wh.at[3].set(w4)
    wh = wh.at[4].set(w5)

    # aux (64, 8) f32: columns 0..6 = biases of layers 0..6 (zero-padded rows),
    # column 7 = final 64->1 weight (kept f32, used on the VPU path).
    aux = jnp.zeros((HIDDEN, 8), jnp.float32)
    for l, b in enumerate((b0, b1, b2, b3, b4, b5, b6)):
        aux = aux.at[: b.shape[0], l].set(b)
    aux = aux.at[:, 7].set(w6.reshape(HIDDEN))

    return (wx.astype(jnp.bfloat16), wh.astype(jnp.bfloat16), aux)


def _round_up(x, m):
    return ((x + m - 1) // m) * m


def _pick_tile(n, cap):
    """Largest lane-aligned tile <= cap that keeps >=2 grid steps when
    possible (megacore sharding) and pad waste below ~12.5% of the batch."""
    n128 = _round_up(n, 128)
    tm = min(cap, n128)

    def waste(t):
        return _round_up(n128, t) - n128

    while tm > 128 and (n128 < 2 * tm or waste(tm) * 8 > n128):
        tm = _round_up(tm // 2, 128)
    return tm


@functools.partial(jax.jit, static_argnames=("tile_cap",))
def sdf_forward(inp, params, tile_cap=2048):
    """Forward pass. inp: (N, latent+2) f32 -> (N, 1) f32."""
    wx, wh, aux = params
    n, din = inp.shape
    assert din == DIN

    tm = _pick_tile(n, tile_cap)
    npad = _round_up(n, tm)
    grid = npad // tm

    # batch-on-lanes: (N, 10) -> (16, Npad), zero padded
    xt = jnp.zeros((DIN_PAD, npad), jnp.float32)
    xt = xt.at[:din, :n].set(inp.T)

    out = pl.pallas_call(
        sdf_mlp_kernel,
        out_shape=jax.ShapeDtypeStruct((1, npad), jnp.float32),
        grid=(grid,),
        in_specs=[
            pl.BlockSpec((DIN_PAD, tm), lambda i: (0, i)),
            pl.BlockSpec(wx.shape, lambda i: (0, 0, 0)),
            pl.BlockSpec(wh.shape, lambda i: (0, 0, 0)),
            pl.BlockSpec(aux.shape, lambda i: (0, 0)),
        ],
        out_specs=pl.BlockSpec((1, tm), lambda i: (0, i)),
        compiler_params=pltpu.CompilerParams(
            dimension_semantics=("parallel",)),
    )(xt, wx, wh, aux)

    return out[0, :n].reshape(n, 1)


def sdf_forward_ref(inp, weights, biases):
    """Pure-JAX f32 reference mirroring the torch forward (eval mode)."""
    x = inp
    for l in range(6):
        if l == 3:                    # l in latent_in
            x = jnp.concatenate([x, inp], axis=1)
        x = jnp.maximum(x @ weights[l].T + biases[l], 0.0)
    return x @ weights[6].T + biases[6]


def sdf_forward_ref_bf16(inp, weights, biases):
    """Reference using the kernel's bf16-operand / f32-accumulate matmuls."""
    def mm(a, w):
        return jnp.dot(a.astype(jnp.bfloat16), w.T.astype(jnp.bfloat16),
                       preferred_element_type=jnp.float32)
    x = inp
    for l in range(6):
        if l == 3:
            x = jnp.concatenate([x, inp], axis=1)
        x = jnp.maximum(mm(x, weights[l]) + biases[l], 0.0)
    return x @ weights[6].T + biases[6]     # final layer stays f32 (as in kernel)


if __name__ == "__main__":
    key = jax.random.PRNGKey(0)
    key, k_inp, k_par = jax.random.split(key, 3)

    n = 1000                                   # deliberately not a tile multiple
    inp = jax.random.normal(k_inp, (n, DIN), jnp.float32)

    weights, biases = init_params(k_par)
    params = pack_params(weights, biases)

    out = jax.block_until_ready(sdf_forward(inp, params))

    ref_f32 = sdf_forward_ref(inp, weights, biases)
    ref_bf16 = sdf_forward_ref_bf16(inp, weights, biases)

    assert out.shape == (n, 1)
    err_bf = float(jnp.max(jnp.abs(out - ref_bf16)))
    err_32 = float(jnp.max(jnp.abs(out - ref_f32)))
    assert err_bf < 5e-3, ("bf16-emulated reference mismatch", err_bf)
    assert err_32 < 5e-2, ("f32 reference mismatch", err_32)

    print("KERNEL_OK")
</pallas_src>

<mosaic_0001>
module attributes {stable_mosaic.version = 11 : i64} {
  func.func @sdf_mlp_kernel(%arg0: i32, %arg1: memref<16x512xf32, #tpu.memory_space<vmem>>, %arg2: memref<2x64x16xbf16, #tpu.memory_space<vmem>>, %arg3: memref<5x64x64xbf16, #tpu.memory_space<vmem>>, %arg4: memref<64x8xf32, #tpu.memory_space<vmem>>, %arg5: memref<1x512xf32, #tpu.memory_space<vmem>>) attributes {dimension_semantics = [#tpu.dimension_semantics<parallel>], iteration_bounds = array<i64: 2>, scalar_prefetch = 0 : i64, scratch_operands = 0 : i64, tpu.core_type = #tpu.core_type<tc>, window_params = [{transform_indices = @transform_0, window_bounds = array<i64: 16, 512>}, {pipeline_mode = #tpu.pipeline_mode<synchronous>, transform_indices = @transform_1, window_bounds = array<i64: 2, 64, 16>}, {pipeline_mode = #tpu.pipeline_mode<synchronous>, transform_indices = @transform_2, window_bounds = array<i64: 5, 64, 64>}, {pipeline_mode = #tpu.pipeline_mode<synchronous>, transform_indices = @transform_3, window_bounds = array<i64: 64, 8>}, {transform_indices = @transform_4, window_bounds = array<i64: 1, 512>}]} {
    %c0 = arith.constant 0 : index
    %c0_0 = arith.constant 0 : index
    %0 = vector.load %arg1[%c0, %c0_0] : memref<16x512xf32, #tpu.memory_space<vmem>>, vector<16x512xf32>
    %1 = arith.truncf %0 : vector<16x512xf32> to vector<16x512xbf16>
    %c0_1 = arith.constant 0 : index
    %c0_2 = arith.constant 0 : index
    %c0_3 = arith.constant 0 : index
    %2 = vector.load %arg2[%c0_1, %c0_2, %c0_3] : memref<2x64x16xbf16, #tpu.memory_space<vmem>>, vector<1x64x16xbf16>
    %3 = vector.shape_cast %2 : vector<1x64x16xbf16> to vector<64x16xbf16>
    %cst = arith.constant dense<0.000000e+00> : vector<64x512xf32>
    %4 = tpu.matmul %3, %1, %cst {dimension_numbers = #tpu.dot_dimension_numbers<[1], [0], [0], [1], [0, 0, 1, 1], [], []>} : vector<64x16xbf16>, vector<16x512xbf16>, vector<64x512xf32> -> vector<64x512xf32>
    %c0_4 = arith.constant 0 : index
    %c0_5 = arith.constant 0 : index
    %5 = vector.load %arg4[%c0_4, %c0_5] : memref<64x8xf32, #tpu.memory_space<vmem>>, vector<64x1xf32>
    %6 = vector.broadcast %5 : vector<64x1xf32> to vector<64x512xf32>
    %7 = arith.addf %4, %6 : vector<64x512xf32>
    %cst_6 = arith.constant 0.000000e+00 : f32
    %8 = vector.broadcast %cst_6 : f32 to vector<64x512xf32>
    %9 = arith.maximumf %7, %8 : vector<64x512xf32>
    %c0_7 = arith.constant 0 : index
    %c0_8 = arith.constant 0 : index
    %c0_9 = arith.constant 0 : index
    %10 = vector.load %arg3[%c0_7, %c0_8, %c0_9] : memref<5x64x64xbf16, #tpu.memory_space<vmem>>, vector<1x64x64xbf16>
    %11 = vector.shape_cast %10 : vector<1x64x64xbf16> to vector<64x64xbf16>
    %12 = arith.truncf %9 : vector<64x512xf32> to vector<64x512xbf16>
    %cst_10 = arith.constant dense<0.000000e+00> : vector<64x512xf32>
    %13 = tpu.matmul %11, %12, %cst_10 {dimension_numbers = #tpu.dot_dimension_numbers<[1], [0], [0], [1], [0, 0, 1, 1], [], []>} : vector<64x64xbf16>, vector<64x512xbf16>, vector<64x512xf32> -> vector<64x512xf32>
    %c0_11 = arith.constant 0 : index
    %c1 = arith.constant 1 : index
    %14 = vector.load %arg4[%c0_11, %c1] : memref<64x8xf32, #tpu.memory_space<vmem>>, vector<64x1xf32>
    %15 = vector.broadcast %14 : vector<64x1xf32> to vector<64x512xf32>
    %16 = arith.addf %13, %15 : vector<64x512xf32>
    %cst_12 = arith.constant 0.000000e+00 : f32
    %17 = vector.broadcast %cst_12 : f32 to vector<64x512xf32>
    %18 = arith.maximumf %16, %17 : vector<64x512xf32>
    %c1_13 = arith.constant 1 : index
    %c0_14 = arith.constant 0 : index
    %c0_15 = arith.constant 0 : index
    %19 = vector.load %arg3[%c1_13, %c0_14, %c0_15] : memref<5x64x64xbf16, #tpu.memory_space<vmem>>, vector<1x64x64xbf16>
    %20 = vector.shape_cast %19 : vector<1x64x64xbf16> to vector<64x64xbf16>
    %21 = arith.truncf %18 : vector<64x512xf32> to vector<64x512xbf16>
    %cst_16 = arith.constant dense<0.000000e+00> : vector<64x512xf32>
    %22 = tpu.matmul %20, %21, %cst_16 {dimension_numbers = #tpu.dot_dimension_numbers<[1], [0], [0], [1], [0, 0, 1, 1], [], []>} : vector<64x64xbf16>, vector<64x512xbf16>, vector<64x512xf32> -> vector<64x512xf32>
    %c0_17 = arith.constant 0 : index
    %c2 = arith.constant 2 : index
    %23 = vector.load %arg4[%c0_17, %c2] : memref<64x8xf32, #tpu.memory_space<vmem>>, vector<64x1xf32>
    %24 = vector.broadcast %23 : vector<64x1xf32> to vector<64x512xf32>
    %25 = arith.addf %22, %24 : vector<64x512xf32>
    %cst_18 = arith.constant 0.000000e+00 : f32
    %26 = vector.broadcast %cst_18 : f32 to vector<64x512xf32>
    %27 = arith.maximumf %25, %26 : vector<64x512xf32>
    %c2_19 = arith.constant 2 : index
    %c0_20 = arith.constant 0 : index
    %c0_21 = arith.constant 0 : index
    %28 = vector.load %arg3[%c2_19, %c0_20, %c0_21] : memref<5x64x64xbf16, #tpu.memory_space<vmem>>, vector<1x64x64xbf16>
    %29 = vector.shape_cast %28 : vector<1x64x64xbf16> to vector<64x64xbf16>
    %30 = arith.truncf %27 : vector<64x512xf32> to vector<64x512xbf16>
    %cst_22 = arith.constant dense<0.000000e+00> : vector<64x512xf32>
    %31 = tpu.matmul %29, %30, %cst_22 {dimension_numbers = #tpu.dot_dimension_numbers<[1], [0], [0], [1], [0, 0, 1, 1], [], []>} : vector<64x64xbf16>, vector<64x512xbf16>, vector<64x512xf32> -> vector<64x512xf32>
    %c1_23 = arith.constant 1 : index
    %c0_24 = arith.constant 0 : index
    %c0_25 = arith.constant 0 : index
    %32 = vector.load %arg2[%c1_23, %c0_24, %c0_25] : memref<2x64x16xbf16, #tpu.memory_space<vmem>>, vector<1x64x16xbf16>
    %33 = vector.shape_cast %32 : vector<1x64x16xbf16> to vector<64x16xbf16>
    %cst_26 = arith.constant dense<0.000000e+00> : vector<64x512xf32>
    %34 = tpu.matmul %33, %1, %cst_26 {dimension_numbers = #tpu.dot_dimension_numbers<[1], [0], [0], [1], [0, 0, 1, 1], [], []>} : vector<64x16xbf16>, vector<16x512xbf16>, vector<64x512xf32> -> vector<64x512xf32>
    %35 = arith.addf %31, %34 : vector<64x512xf32>
    %c0_27 = arith.constant 0 : index
    %c3 = arith.constant 3 : index
    %36 = vector.load %arg4[%c0_27, %c3] : memref<64x8xf32, #tpu.memory_space<vmem>>, vector<64x1xf32>
    %37 = vector.broadcast %36 : vector<64x1xf32> to vector<64x512xf32>
    %38 = arith.addf %35, %37 : vector<64x512xf32>
    %cst_28 = arith.constant 0.000000e+00 : f32
    %39 = vector.broadcast %cst_28 : f32 to vector<64x512xf32>
    %40 = arith.maximumf %38, %39 : vector<64x512xf32>
    %c3_29 = arith.constant 3 : index
    %c0_30 = arith.constant 0 : index
    %c0_31 = arith.constant 0 : index
    %41 = vector.load %arg3[%c3_29, %c0_30, %c0_31] : memref<5x64x64xbf16, #tpu.memory_space<vmem>>, vector<1x64x64xbf16>
    %42 = vector.shape_cast %41 : vector<1x64x64xbf16> to vector<64x64xbf16>
    %43 = arith.truncf %40 : vector<64x512xf32> to vector<64x512xbf16>
    %cst_32 = arith.constant dense<0.000000e+00> : vector<64x512xf32>
    %44 = tpu.matmul %42, %43, %cst_32 {dimension_numbers = #tpu.dot_dimension_numbers<[1], [0], [0], [1], [0, 0, 1, 1], [], []>} : vector<64x64xbf16>, vector<64x512xbf16>, vector<64x512xf32> -> vector<64x512xf32>
    %c0_33 = arith.constant 0 : index
    %c4 = arith.constant 4 : index
    %45 = vector.load %arg4[%c0_33, %c4] : memref<64x8xf32, #tpu.memory_space<vmem>>, vector<64x1xf32>
    %46 = vector.broadcast %45 : vector<64x1xf32> to vector<64x512xf32>
    %47 = arith.addf %44, %46 : vector<64x512xf32>
    %cst_34 = arith.constant 0.000000e+00 : f32
    %48 = vector.broadcast %cst_34 : f32 to vector<64x512xf32>
    %49 = arith.maximumf %47, %48 : vector<64x512xf32>
    %c4_35 = arith.constant 4 : index
    %c0_36 = arith.constant 0 : index
    %c0_37 = arith.constant 0 : index
    %50 = vector.load %arg3[%c4_35, %c0_36, %c0_37] : memref<5x64x64xbf16, #tpu.memory_space<vmem>>, vector<1x64x64xbf16>
    %51 = vector.shape_cast %50 : vector<1x64x64xbf16> to vector<64x64xbf16>
    %52 = arith.truncf %49 : vector<64x512xf32> to vector<64x512xbf16>
    %cst_38 = arith.constant dense<0.000000e+00> : vector<64x512xf32>
    %53 = tpu.matmul %51, %52, %cst_38 {dimension_numbers = #tpu.dot_dimension_numbers<[1], [0], [0], [1], [0, 0, 1, 1], [], []>} : vector<64x64xbf16>, vector<64x512xbf16>, vector<64x512xf32> -> vector<64x512xf32>
    %c0_39 = arith.constant 0 : index
    %c5 = arith.constant 5 : index
    %54 = vector.load %arg4[%c0_39, %c5] : memref<64x8xf32, #tpu.memory_space<vmem>>, vector<64x1xf32>
    %55 = vector.broadcast %54 : vector<64x1xf32> to vector<64x512xf32>
    %56 = arith.addf %53, %55 : vector<64x512xf32>
    %cst_40 = arith.constant 0.000000e+00 : f32
    %57 = vector.broadcast %cst_40 : f32 to vector<64x512xf32>
    %58 = arith.maximumf %56, %57 : vector<64x512xf32>
    %c0_41 = arith.constant 0 : index
    %c7 = arith.constant 7 : index
    %59 = vector.load %arg4[%c0_41, %c7] : memref<64x8xf32, #tpu.memory_space<vmem>>, vector<64x1xf32>
    %c0_42 = arith.constant 0 : index
    %c6 = arith.constant 6 : index
    %60 = vector.load %arg4[%c0_42, %c6] : memref<64x8xf32, #tpu.memory_space<vmem>>, vector<1x1xf32>
    %61 = vector.broadcast %59 : vector<64x1xf32> to vector<64x512xf32>
    %62 = arith.mulf %61, %58 : vector<64x512xf32>
    %cst_43 = arith.constant dense<0.000000e+00> : vector<512xf32>
    %63 = vector.multi_reduction <add>, %62, %cst_43 [0] : vector<64x512xf32> to vector<512xf32>
    %64 = vector.shape_cast %63 : vector<512xf32> to vector<1x512xf32>
    %65 = vector.broadcast %60 : vector<1x1xf32> to vector<1x512xf32>
    %66 = arith.addf %64, %65 : vector<1x512xf32>
    %c0_44 = arith.constant 0 : index
    %c0_45 = arith.constant 0 : index
    %67 = vector.load %arg5[%c0_44, %c0_45] : memref<1x512xf32, #tpu.memory_space<vmem>>, vector<1x512xf32>
    tpu.vector_store %arg5[%c0_44, %c0_45], %66 {strides = array<i32>} : memref<1x512xf32, #tpu.memory_space<vmem>>, vector<1x512xf32>,
    return
  }
  func.func @transform_0(%arg0: i32) -> (i32, i32) {
    %c0_i32 = arith.constant 0 : i32
    %c0_i32_0 = arith.constant 0 : i32
    return %c0_i32, %arg0 : i32, i32
  }
  func.func @transform_1(%arg0: i32) -> (i32, i32, i32) {
    %c0_i32 = arith.constant 0 : i32
    %c0_i32_0 = arith.constant 0 : i32
    %c0_i32_1 = arith.constant 0 : i32
    %c0_i32_2 = arith.constant 0 : i32
    return %c0_i32, %c0_i32_0, %c0_i32_1 : i32, i32, i32
  }
  func.func @transform_2(%arg0: i32) -> (i32, i32, i32) {
    %c0_i32 = arith.constant 0 : i32
    %c0_i32_0 = arith.constant 0 : i32
    %c0_i32_1 = arith.constant 0 : i32
    %c0_i32_2 = arith.constant 0 : i32
    return %c0_i32, %c0_i32_0, %c0_i32_1 : i32, i32, i32
  }
  func.func @transform_3(%arg0: i32) -> (i32, i32) {
    %c0_i32 = arith.constant 0 : i32
    %c0_i32_0 = arith.constant 0 : i32
    %c0_i32_1 = arith.constant 0 : i32
    return %c0_i32, %c0_i32_0 : i32, i32
  }
  func.func @transform_4(%arg0: i32) -> (i32, i32) {
    %c0_i32 = arith.constant 0 : i32
    %c0_i32_0 = arith.constant 0 : i32
    return %c0_i32, %arg0 : i32, i32
  }
}

</mosaic_0001>

<llo_original>
// kernel: sdf_forward.1
$region0: #{sdf_forward.1}
  #allocation0 [shape = 'u32[]', space=smem, size = 0x4, offset = 0x4, fixed_abs, tag = 'smem constant byte address 0x4 - core index']
  #allocation1 [shape = 'u32[144,128]{1,0:T(1,128)}', space=vmem, size = 0x12000, scoped, tag = 'internal scratch']
  %s0 = inlined_call_operand.vmem [shape: f32[16,1024], index: 0, kind: input, shape index: {}]
  %s1 = inlined_call_operand.vmem [shape: bf16[2,64,16], index: 1, kind: input, shape index: {}]
  %s2 = inlined_call_operand.vmem [shape: bf16[5,64,64], index: 2, kind: input, shape index: {}]
  %s3 = inlined_call_operand.vmem [shape: f32[64,8], index: 3, kind: input, shape index: {}]
  %s4 = inlined_call_operand.vmem [shape: f32[1,1024], index: 4, kind: output, shape index: {}]
  %s5 = sld [smem:[#allocation0]]
  $region72: #{sdf_forward.1} parent=0
    _
  %s7 = ssub.s32 1, %s5
  %s8 = scalar_select 0, %s7, %s5
  $region1: #{sdf_forward.1} parent=0
    #allocation2 [shape = 'u8[65536]{0}', space=vmem, size = 0x10000, scoped, tag = 'input window, operand 0']
    loop: start=0, step=1, limit=4
    $region2: #{sdf_forward.1} parent=1 // loop_pre_header
      _
    $region3: #{sdf_forward.1} parent=1 // loop_header
      %s10 = sphi 0, %s14
      %p11 = scmp.ge.s32.totalorder %s10, 4
      %s20 = sphi 0, %s22
      %s23 = sphi 0, %s20
      %s24 = sphi 0, %s23
      %s40 = sphi 0, %s24
      %s44 = sphi 0, %s44
      %s46 = sphi 0, %s44
      %s47 = sphi 0, %s46
      %s61 = sphi 0, %s47
      %s65 = sphi 0, %s65
      %s67 = sphi 0, %s65
      %s68 = sphi 0, %s67
      %s82 = sphi 0, %s68
      %s86 = sphi 0, %s86
      %s88 = sphi 0, %s86
      %s89 = sphi 0, %s88
      %s103 = sphi 0, %s89
      %s109 = sphi 0, %s111
      %s112 = sphi 0, %s109
      %s113 = sphi 0, %s112
      %s129 = sphi 0, %s113
    $region4: #{sdf_forward.1} parent=1 // loop_header_branch
      %13 = sbr.rel (%p11) target = $region8
    $region5: #{sdf_forward.1} parent=1 // loop_body
      %s15 = ssub.s32 %s10, 1
      %s16 = ssub.s32 %s10, 2
      %s17 = sadd.s32 %s10, 1
      %s18 = ssub.s32 %s10, %s17
      %p19 = scmp.eq.s32.totalorder %s18, 0
      %s21 = sadd.s32 %s20, 1
      %s22 = scalar_select %p19, %s20, %s21
      %p25 = pneg %p19
      %p26 = scmp.eq.s32.totalorder %s10, 1
      %p27 = por %p25, %p26
      %p28 = scmp.ne.s32.totalorder %s20, %s23
      %p29 = scmp.eq.s32.totalorder %s10, 0
      %p30 = por %p28, %p29
      %p31 = scmp.ne.s32.totalorder %s20, %s23
      %p32 = scmp.eq.s32.totalorder %s15, 1
      %p33 = por %p31, %p32
      %p34 = scmp.ne.s32.totalorder %s23, %s24
      %p35 = scmp.eq.s32.totalorder %s15, 0
      %p36 = por %p34, %p35
      %p37 = scmp.ne.s32.totalorder %s23, %s24
      %p38 = scmp.eq.s32.totalorder %s16, 1
      %p39 = por %p37, %p38
      %p41 = scmp.ne.s32.totalorder %s24, %s40
      %p42 = scmp.eq.s32.totalorder %s16, 0
      %p43 = por %p41, %p42
      %s45 = sadd.s32 %s44, 1
      %p48 = scmp.eq.s32.totalorder %s10, 1
      %p49 = scmp.ne.s32.totalorder %s44, %s46
      %p50 = scmp.eq.s32.totalorder %s10, 0
      %p51 = por %p49, %p50
      %p52 = scmp.ne.s32.totalorder %s44, %s46
      %p53 = scmp.eq.s32.totalorder %s15, 1
      %p54 = por %p52, %p53
      %p55 = scmp.ne.s32.totalorder %s46, %s47
      %p56 = scmp.eq.s32.totalorder %s15, 0
      %p57 = por %p55, %p56
      %p58 = scmp.ne.s32.totalorder %s46, %s47
      %p59 = scmp.eq.s32.totalorder %s16, 1
      %p60 = por %p58, %p59
      %p62 = scmp.ne.s32.totalorder %s47, %s61
      %p63 = scmp.eq.s32.totalorder %s16, 0
      %p64 = por %p62, %p63
      %s66 = sadd.s32 %s65, 1
      %p69 = scmp.eq.s32.totalorder %s10, 1
      %p70 = scmp.ne.s32.totalorder %s65, %s67
      %p71 = scmp.eq.s32.totalorder %s10, 0
      %p72 = por %p70, %p71
      %p73 = scmp.ne.s32.totalorder %s65, %s67
      %p74 = scmp.eq.s32.totalorder %s15, 1
      %p75 = por %p73, %p74
      %p76 = scmp.ne.s32.totalorder %s67, %s68
      %p77 = scmp.eq.s32.totalorder %s15, 0
      %p78 = por %p76, %p77
      %p79 = scmp.ne.s32.totalorder %s67, %s68
      %p80 = scmp.eq.s32.totalorder %s16, 1
      %p81 = por %p79, %p80
      %p83 = scmp.ne.s32.totalorder %s68, %s82
      %p84 = scmp.eq.s32.totalorder %s16, 0
      %p85 = por %p83, %p84
      %s87 = sadd.s32 %s86, 1
      %p90 = scmp.eq.s32.totalorder %s10, 1
      %p91 = scmp.ne.s32.totalorder %s86, %s88
      %p92 = scmp.eq.s32.totalorder %s10, 0
      %p93 = por %p91, %p92
      %p94 = scmp.ne.s32.totalorder %s86, %s88
      %p95 = scmp.eq.s32.totalorder %s15, 1
      %p96 = por %p94, %p95
      %p97 = scmp.ne.s32.totalorder %s88, %s89
      %p98 = scmp.eq.s32.totalorder %s15, 0
      %p99 = por %p97, %p98
      %p100 = scmp.ne.s32.totalorder %s88, %s89
      %p101 = scmp.eq.s32.totalorder %s16, 1
      %p102 = por %p100, %p101
      %p104 = scmp.ne.s32.totalorder %s89, %s103
      %p105 = scmp.eq.s32.totalorder %s16, 0
      %p106 = por %p104, %p105
      %s107 = ssub.s32 %s10, %s17
      %p108 = scmp.eq.s32.totalorder %s107, 0
      %s110 = sadd.s32 %s109, 1
      %s111 = scalar_select %p108, %s109, %s110
      %p114 = pneg %p108
      %p115 = scmp.eq.s32.totalorder %s10, 1
      %p116 = por %p114, %p115
      %p117 = scmp.ne.s32.totalorder %s109, %s112
      %p118 = scmp.eq.s32.totalorder %s10, 0
      %p119 = por %p117, %p118
      %p120 = scmp.ne.s32.totalorder %s109, %s112
      %p121 = scmp.eq.s32.totalorder %s15, 1
      %p122 = por %p120, %p121
      %p123 = scmp.ne.s32.totalorder %s112, %s113
      %p124 = scmp.eq.s32.totalorder %s15, 0
      %p125 = por %p123, %p124
      %p126 = scmp.ne.s32.totalorder %s112, %s113
      %p127 = scmp.eq.s32.totalorder %s16, 1
      %p128 = por %p126, %p127
      %p130 = scmp.ne.s32.totalorder %s113, %s129
      %p131 = scmp.eq.s32.totalorder %s16, 0
      %p132 = por %p130, %p131
      %p133 = scmp.le.s32.totalorder 1, %s10
      %p134 = scmp.lt.s32.totalorder %s10, 3
      %p135 = pnand %p133, %p134
      %p136 = pneg %p135
      // Predicated region
      $region9: #{sdf_forward.1} parent=5 // pred_check
        _
      $region10: #{sdf_forward.1} parent=5 // pred_check_branch
        %138 = sbr.rel (%p135) target = $region12
      $region11: #{sdf_forward.1} parent=5 // pred_region
        %s139 = ssub.s32 %s10, 1
        // Predicated region
        $region13: #{sdf_forward.1} parent=11 // pred_check
          %p140 = pneg %p57
        $region14: #{sdf_forward.1} parent=11 // pred_check_branch
          %142 = sbr.rel (%p140) target = $region16
        $region15: #{sdf_forward.1} parent=11 // pred_region
          _
        $region16: #{sdf_forward.1} parent=11 // pred_fallthru
          _
        // Predicated region
        $region17: #{sdf_forward.1} parent=11 // pred_check
          %p143 = pneg %p78
        $region18: #{sdf_forward.1} parent=11 // pred_check_branch
          %145 = sbr.rel (%p143) target = $region20
        $region19: #{sdf_forward.1} parent=11 // pred_region
          _
        $region20: #{sdf_forward.1} parent=11 // pred_fallthru
          _
        // Predicated region
        $region21: #{sdf_forward.1} parent=11 // pred_check
          %p146 = pneg %p99
        $region22: #{sdf_forward.1} parent=11 // pred_check_branch
          %148 = sbr.rel (%p146) target = $region24
        $region23: #{sdf_forward.1} parent=11 // pred_region
          _
        $region24: #{sdf_forward.1} parent=11 // pred_fallthru
          _
      $region12: #{sdf_forward.1} parent=5 // pred_fallthru
        _
      %p149 = scmp.lt.s32.totalorder %s10, 2
      // Predicated region
      $region25: #{sdf_forward.1} parent=5 // pred_check
        %p150 = pneg %p149
      $region26: #{sdf_forward.1} parent=5 // pred_check_branch
        %152 = sbr.rel (%p150) target = $region28
      $region27: #{sdf_forward.1} parent=5 // pred_region
        // Predicated region
        $region29: #{sdf_forward.1} parent=27 // pred_check
          %p153 = pneg %p30
        $region30: #{sdf_forward.1} parent=27 // pred_check_branch
          %155 = sbr.rel (%p153) target = $region32
        $region31: #{sdf_forward.1} parent=27 // pred_region
          %s156 = sand.u32 %s20, 1
          %s157 = sand.u32 %s20, 1
          %s158 = smul.addr %s157, 64
          %s159 = scalar_lea.vmem [#allocation2], %s158
          %s160 = smul.u32 4, %s10
          %s161 = smul.addr %s160, 8
          %s162 = scalar_lea.vmem %s0, %s161
          // Predicated region
          $region33: #{sdf_forward.1} parent=31 // pred_check
            _
          $region34: #{sdf_forward.1} parent=31 // pred_check_branch
            %164 = sbr.rel (0) target = $region36
          $region35: #{sdf_forward.1} parent=31 // pred_region
            // Predicated region
            $region37: #{sdf_forward.1} parent=35 // pred_check
              _
            $region38: #{sdf_forward.1} parent=35 // pred_check_branch
              %166 = sbr.rel (0) target = $region40
            $region39: #{sdf_forward.1} parent=35 // pred_region
              loop: start=0, step=1, limit=1
              $region41: #{sdf_forward.1} parent=39 // loop_pre_header
                _
              $region42: #{sdf_forward.1} parent=39 // loop_header
                %s168 = sphi 0, %s172
                %p169 = scmp.ge.s32.totalorder %s168, 1
                %s173 = sphi %s162, %s162
                %s174 = sphi %s159, %s159
              $region43: #{sdf_forward.1} parent=39 // loop_header_branch
                %171 = sbr.rel (%p169) target = $region47
              $region44: #{sdf_forward.1} parent=39 // loop_body
                %v175 = vld [vmem:[%s173] sm:$0xff]
                %176 = vst [vmem:[%s174] sm:$0xff] %v175
                %v177 = vld [vmem:[%s173 + $0x8] sm:$0xff]
                %178 = vst [vmem:[%s174 + $0x8] sm:$0xff] %v177
                %v179 = vld [vmem:[%s173 + $0x10] sm:$0xff]
                %180 = vst [vmem:[%s174 + $0x10] sm:$0xff] %v179
                %v181 = vld [vmem:[%s173 + $0x18] sm:$0xff]
                %182 = vst [vmem:[%s174 + $0x18] sm:$0xff] %v181
                %v183 = vld [vmem:[%s173 + $0x40] sm:$0xff]
                %184 = vst [vmem:[%s174 + $0x20] sm:$0xff] %v183
                %v185 = vld [vmem:[%s173 + $0x48] sm:$0xff]
                %186 = vst [vmem:[%s174 + $0x28] sm:$0xff] %v185
                %v187 = vld [vmem:[%s173 + $0x50] sm:$0xff]
                %188 = vst [vmem:[%s174 + $0x30] sm:$0xff] %v187
                %v189 = vld [vmem:[%s173 + $0x58] sm:$0xff]
                %190 = vst [vmem:[%s174 + $0x38] sm:$0xff] %v189
              $region45: #{sdf_forward.1} parent=39 // loop_footer
                %s172 = sadd.s32 1, %s168
              $region46: #{sdf_forward.1} parent=39 // loop_footer_branch
                %167 = sbr.rel target = $region42
              $region47: #{sdf_forward.1} parent=39 // loop_exit
                _
            $region40: #{sdf_forward.1} parent=35 // pred_fallthru
              _
            // Predicated region
            $region48: #{sdf_forward.1} parent=35 // pred_check
              _
            $region49: #{sdf_forward.1} parent=35 // pred_check_branch
              %192 = sbr.rel target = $region51
            $region50: #{sdf_forward.1} parent=35 // pred_region
              _
            $region51: #{sdf_forward.1} parent=35 // pred_fallthru
              _
          $region36: #{sdf_forward.1} parent=31 // pred_fallthru
            _
          %193 = vnop
        $region32: #{sdf_forward.1} parent=27 // pred_fallthru
          _
      $region28: #{sdf_forward.1} parent=5 // pred_fallthru
        _
      %p194 = scmp.le.s32.totalorder 1, %s10
      %p195 = scmp.lt.s32.totalorder %s10, 3
      %p196 = pnand %p194, %p195
      %p197 = pneg %p196
      // Predicated region
      $region52: #{sdf_forward.1} parent=5 // pred_check
        _
      $region53: #{sdf_forward.1} parent=5 // pred_check_branch
        %199 = sbr.rel (%p196) target = $region55
      $region54: #{sdf_forward.1} parent=5 // pred_region
        %s200 = ssub.s32 %s10, 1
        %s201 = sand.u32 %s23, 1
        %s202 = sand.u32 %s23, 1
        %s203 = smul.addr %s202, 64
        %s204 = scalar_lea.vmem [#allocation2], %s203
        // Predicated region
        $region56: #{sdf_forward.1} parent=54 // pred_check
          %p205 = pneg %p36
        $region57: #{sdf_forward.1} parent=54 // pred_check_branch
          %207 = sbr.rel (%p205) target = $region59
        $region58: #{sdf_forward.1} parent=54 // pred_region
          _
        $region59: #{sdf_forward.1} parent=54 // pred_fallthru
          _
        %s208 = sand.u32 %s23, 1
        %s209 = sand.u32 %s23, 1
        %s210 = smul.addr %s209, 64
        %s211 = scalar_lea.vmem [#allocation2], %s210
        %p212 = pneg %p36
        %p213 = pneg %p33
        %p214 = pneg %p57
        %p215 = pneg %p54
        %p216 = pneg %p78
        %p217 = pneg %p75
        %p218 = pneg %p99
        %p219 = pneg %p96
        %p220 = pneg %p125
        %p221 = pneg %p122
        %s222 = smul.u32 4, %s15
        %p223 = scmp.lt.s32.totalorder %s222, 7
        %s224 = scalar_select %p223, %s222, 7
        %s225 = scalar_lea.vmem %s4, %s224
        %s226 = smul.u32 4, %s15
        %s227 = smul.u32 4, %s15
        %p228 = scmp.lt.s32.totalorder %s227, 7
        %s229 = scalar_select %p228, %s227, 7
        %s230 = scalar_lea.vmem %s4, %s229
        %s231 = smul.u32 4, %s15
        %v233 = vld [vmem:[%s204] sm:$0xff]
        %v234 = vld [vmem:[%s204 + $0x8] sm:$0xff]
        %v235 = vld [vmem:[%s204 + $0x10] sm:$0xff]
        %v236 = vld [vmem:[%s204 + $0x18] sm:$0xff]
        %v237 = vld [vmem:[%s204 + $0x20] sm:$0xff]
        %v238 = vld [vmem:[%s204 + $0x28] sm:$0xff]
        %v239 = vld [vmem:[%s204 + $0x30] sm:$0xff]
        %v240 = vld [vmem:[%s204 + $0x38] sm:$0xff]
        %v241 = vpack.c.bf16 %v237, %v233
        %v242 = vpack.c.bf16 %v238, %v234
        %v243 = vpack.c.bf16 %v239, %v235
        %v244 = vpack.c.bf16 %v240, %v236
        %v245 = vld [vmem:[%s1] sm:$0xf]
        %v246 = vld [vmem:[%s1 + $0x4] sm:$0xf]
        %v247 = vld [vmem:[%s1 + $0x8] sm:$0xf]
        %v248 = vld [vmem:[%s1 + $0xc] sm:$0xf]
        %v249 = vld [vmem:[%s1 + $0x10] sm:$0xf]
        %v250 = vld [vmem:[%s1 + $0x14] sm:$0xf]
        %v251 = vld [vmem:[%s1 + $0x18] sm:$0xf]
        %v252 = vld [vmem:[%s1 + $0x1c] sm:$0xf]
        %v253 = vld [vmem:[%s3] sm:$0xff]
        %v254 = vld [vmem:[%s3 + $0x8] sm:$0xff]
        %v255 = vld [vmem:[%s3 + $0x10] sm:$0xff]
        %v256 = vld [vmem:[%s3 + $0x18] sm:$0xff]
        %v257 = vld [vmem:[%s3 + $0x20] sm:$0xff]
        %v258 = vld [vmem:[%s3 + $0x28] sm:$0xff]
        %v259 = vld [vmem:[%s3 + $0x30] sm:$0xff]
        %v260 = vld [vmem:[%s3 + $0x38] sm:$0xff]
        %262 = vset.pattern.permute.xlu0 0
        %263 = vperm.xlu0 %262, %v253
        %v264 = vpop.permute.xlu0 %263
        %267 = vset.pattern.permute.xlu0 0
        %268 = vperm.xlu0 %267, %v254
        %v269 = vpop.permute.xlu0 %268
        %272 = vset.pattern.permute.xlu0 0
        %273 = vperm.xlu0 %272, %v255
        %v274 = vpop.permute.xlu0 %273
        %277 = vset.pattern.permute.xlu0 0
        %278 = vperm.xlu0 %277, %v256
        %v279 = vpop.permute.xlu0 %278
        %282 = vset.pattern.permute.xlu0 0
        %283 = vperm.xlu0 %282, %v257
        %v284 = vpop.permute.xlu0 %283
        %287 = vset.pattern.permute.xlu0 0
        %288 = vperm.xlu0 %287, %v258
        %v289 = vpop.permute.xlu0 %288
        %292 = vset.pattern.permute.xlu0 0
        %293 = vperm.xlu0 %292, %v259
        %v294 = vpop.permute.xlu0 %293
        %297 = vset.pattern.permute.xlu0 0
        %298 = vperm.xlu0 %297, %v260
        %v299 = vpop.permute.xlu0 %298
        %v309 = vunpack.c.l.b16 %v245
        %v310 = vunpack.c.l.b16 %v246
        %v311 = vunpack.c.l.b16 %v247
        %v312 = vunpack.c.l.b16 %v248
        %v313 = vunpack.c.l.b16 %v249
        %v314 = vunpack.c.l.b16 %v250
        %v315 = vunpack.c.l.b16 %v251
        %v316 = vunpack.c.l.b16 %v252
        %v317 = vpack.c.b16 %v310, %v309
        %v318 = vpack.c.b16 %v312, %v311
        %v319 = vpack.c.b16 %v314, %v313
        %v320 = vpack.c.b16 %v316, %v315
        %vm321 = vcmask 130048
        %v323 = vsel %vm321, %v317, 0
        %v326 = vsel %vm321, %v318, 0
        %v329 = vsel %vm321, %v319, 0
        %v332 = vsel %vm321, %v320, 0
        %334 = vmatprep.subr.bf16.mxu0 0
        %335 = vmatpush1.bf16.msra.mxu0 0
        %336 = vmatprep.subr.bf16.mxu0 0
        %337 = vmatpush1.bf16.msra.mxu0 0
        %338 = vmatprep.subr.bf16.mxu0 0
        %339 = vmatpush1.bf16.msra.mxu0 0
        %340 = vmatprep.subr.bf16.mxu0 0
        %341 = vmatpush1.bf16.msra.mxu0 0
        %342 = vmatprep.subr.bf16.mxu0 0
        %343 = vmatpush1.bf16.msra.mxu0 0
        %344 = vmatprep.subr.bf16.mxu0 0
        %345 = vmatpush1.bf16.msra.mxu0 0
        %346 = vmatprep.subr.bf16.mxu0 0
        %347 = vmatpush1.bf16.msra.mxu0 0
        %348 = vmatprep.subr.bf16.mxu0 %v242
        %349 = vmatpush1.bf16.msra.mxu0 %v241
        %350 = vmatprep.subr.bf16.mxu0 0
        %351 = vmatpush2.bf16.msra.mxu0 0
        %352 = vmatprep.subr.bf16.mxu0 0
        %353 = vmatpush2.bf16.msra.mxu0 0
        %354 = vmatprep.subr.bf16.mxu0 0
        %355 = vmatpush2.bf16.msra.mxu0 0
        %356 = vmatprep.subr.bf16.mxu0 0
        %357 = vmatpush2.bf16.msra.mxu0 0
        %358 = vmatprep.subr.bf16.mxu0 0
        %359 = vmatpush2.bf16.msra.mxu0 0
        %360 = vmatprep.subr.bf16.mxu0 0
        %361 = vmatpush2.bf16.msra.mxu0 0
        %362 = vmatprep.subr.bf16.mxu0 0
        %363 = vmatpush2.bf16.msra.mxu0 0
        %364 = vmatprep.subr.bf16.mxu0 0
        %365 = vmatpush2.bf16.msra.mxu0 0
        %366 = vmatprep.mubr.bf16.mxu0 0
        %367 = vmatmul.mubr.bf16.gmra.mxu0 %v323
        %v368 = vpop.f32.mrf.mxu0
        %v369 = vadd.f32 %v264, %v368
        %v370 = vpop.f32.mrf.mxu0
        %v371 = vadd.f32 %v264, %v370
        %v372 = vpop.f32.mrf.mxu0
        %v373 = vadd.f32 %v269, %v372
        %v374 = vpop.f32.mrf.mxu0
        %v375 = vadd.f32 %v269, %v374
        %376 = vmatprep.mubr.bf16.mxu0 0
        %377 = vmatmul.mubr.bf16.gmra.mxu0 %v326
        %v378 = vpop.f32.mrf.mxu0
        %v379 = vadd.f32 %v274, %v378
        %v380 = vpop.f32.mrf.mxu0
        %v381 = vadd.f32 %v274, %v380
        %v382 = vpop.f32.mrf.mxu0
        %v383 = vadd.f32 %v279, %v382
        %v384 = vpop.f32.mrf.mxu0
        %v385 = vadd.f32 %v279, %v384
        %386 = vmatprep.mubr.bf16.mxu0 0
        %387 = vmatmul.mubr.bf16.gmra.mxu0 %v329
        %v388 = vpop.f32.mrf.mxu0
        %v389 = vadd.f32 %v284, %v388
        %v390 = vpop.f32.mrf.mxu0
        %v391 = vadd.f32 %v284, %v390
        %v392 = vpop.f32.mrf.mxu0
        %v393 = vadd.f32 %v289, %v392
        %v394 = vpop.f32.mrf.mxu0
        %v395 = vadd.f32 %v289, %v394
        %396 = vmatprep.mubr.bf16.mxu0 0
        %397 = vmatmul.mubr.bf16.gmra.mxu0 %v332
        %v398 = vpop.f32.mrf.mxu0
        %v399 = vadd.f32 %v294, %v398
        %v400 = vpop.f32.mrf.mxu0
        %v401 = vadd.f32 %v294, %v400
        %v402 = vpop.f32.mrf.mxu0
        %v403 = vadd.f32 %v299, %v402
        %v404 = vpop.f32.mrf.mxu0
        %v405 = vadd.f32 %v299, %v404
        %406 = vdwg.mxu0
        %407 = vmatprep.subr.bf16.mxu0 0
        %408 = vmatpush1.bf16.msra.mxu0 0
        %409 = vmatprep.subr.bf16.mxu0 0
        %410 = vmatpush1.bf16.msra.mxu0 0
        %411 = vmatprep.subr.bf16.mxu0 0
        %412 = vmatpush1.bf16.msra.mxu0 0
        %413 = vmatprep.subr.bf16.mxu0 0
        %414 = vmatpush1.bf16.msra.mxu0 0
        %415 = vmatprep.subr.bf16.mxu0 0
        %416 = vmatpush1.bf16.msra.mxu0 0
        %417 = vmatprep.subr.bf16.mxu0 0
        %418 = vmatpush1.bf16.msra.mxu0 0
        %419 = vmatprep.subr.bf16.mxu0 0
        %420 = vmatpush1.bf16.msra.mxu0 0
        %421 = vmatprep.subr.bf16.mxu0 %v244
        %422 = vmatpush1.bf16.msra.mxu0 %v243
        %423 = vmatprep.subr.bf16.mxu0 0
        %424 = vmatpush2.bf16.msra.mxu0 0
        %425 = vmatprep.subr.bf16.mxu0 0
        %426 = vmatpush2.bf16.msra.mxu0 0
        %427 = vmatprep.subr.bf16.mxu0 0
        %428 = vmatpush2.bf16.msra.mxu0 0
        %429 = vmatprep.subr.bf16.mxu0 0
        %430 = vmatpush2.bf16.msra.mxu0 0
        %431 = vmatprep.subr.bf16.mxu0 0
        %432 = vmatpush2.bf16.msra.mxu0 0
        %433 = vmatprep.subr.bf16.mxu0 0
        %434 = vmatpush2.bf16.msra.mxu0 0
        %435 = vmatprep.subr.bf16.mxu0 0
        %436 = vmatpush2.bf16.msra.mxu0 0
        %437 = vmatprep.subr.bf16.mxu0 0
        %438 = vmatpush2.bf16.msra.mxu0 0
        %439 = vmatprep.mubr.bf16.mxu0 0
        %440 = vmatmul.mubr.bf16.gmra.mxu0 %v323
        %v441 = vpop.f32.mrf.mxu0
        %v442 = vadd.f32 %v264, %v441
        %v443 = vpop.f32.mrf.mxu0
        %v444 = vadd.f32 %v264, %v443
        %v445 = vpop.f32.mrf.mxu0
        %v446 = vadd.f32 %v269, %v445
        %v447 = vpop.f32.mrf.mxu0
        %v448 = vadd.f32 %v269, %v447
        %449 = vmatprep.mubr.bf16.mxu0 0
        %450 = vmatmul.mubr.bf16.gmra.mxu0 %v326
        %v451 = vpop.f32.mrf.mxu0
        %v452 = vadd.f32 %v274, %v451
        %v453 = vpop.f32.mrf.mxu0
        %v454 = vadd.f32 %v274, %v453
        %v455 = vpop.f32.mrf.mxu0
        %v456 = vadd.f32 %v279, %v455
        %v457 = vpop.f32.mrf.mxu0
        %v458 = vadd.f32 %v279, %v457
        %459 = vmatprep.mubr.bf16.mxu0 0
        %460 = vmatmul.mubr.bf16.gmra.mxu0 %v329
        %v461 = vpop.f32.mrf.mxu0
        %v462 = vadd.f32 %v284, %v461
        %v463 = vpop.f32.mrf.mxu0
        %v464 = vadd.f32 %v284, %v463
        %v465 = vpop.f32.mrf.mxu0
        %v466 = vadd.f32 %v289, %v465
        %v467 = vpop.f32.mrf.mxu0
        %v468 = vadd.f32 %v289, %v467
        %469 = vmatprep.mubr.bf16.mxu0 0
        %470 = vmatmul.mubr.bf16.gmra.mxu0 %v332
        %v471 = vpop.f32.mrf.mxu0
        %v472 = vadd.f32 %v294, %v471
        %v473 = vpop.f32.mrf.mxu0
        %v474 = vadd.f32 %v294, %v473
        %v475 = vpop.f32.mrf.mxu0
        %v476 = vadd.f32 %v299, %v475
        %v477 = vpop.f32.mrf.mxu0
        %v478 = vadd.f32 %v299, %v477
        %479 = vdwg.mxu0
        %v480 = vmax.f32 %v369, 0.0
        %v481 = vmax.f32 %v371, 0.0
        %v482 = vmax.f32 %v442, 0.0
        %v483 = vmax.f32 %v444, 0.0
        %v484 = vmax.f32 %v373, 0.0
        %v485 = vmax.f32 %v375, 0.0
        %v486 = vmax.f32 %v446, 0.0
        %v487 = vmax.f32 %v448, 0.0
        %v488 = vmax.f32 %v379, 0.0
        %v489 = vmax.f32 %v381, 0.0
        %v490 = vmax.f32 %v452, 0.0
        %v491 = vmax.f32 %v454, 0.0
        %v492 = vmax.f32 %v383, 0.0
        %v493 = vmax.f32 %v385, 0.0
        %v494 = vmax.f32 %v456, 0.0
        %v495 = vmax.f32 %v458, 0.0
        %v496 = vmax.f32 %v389, 0.0
        %v497 = vmax.f32 %v391, 0.0
        %v498 = vmax.f32 %v462, 0.0
        %v499 = vmax.f32 %v464, 0.0
        %v500 = vmax.f32 %v393, 0.0
        %v501 = vmax.f32 %v395, 0.0
        %v502 = vmax.f32 %v466, 0.0
        %v503 = vmax.f32 %v468, 0.0
        %v504 = vmax.f32 %v399, 0.0
        %v505 = vmax.f32 %v401, 0.0
        %v506 = vmax.f32 %v472, 0.0
        %v507 = vmax.f32 %v474, 0.0
        %v508 = vmax.f32 %v403, 0.0
        %v509 = vmax.f32 %v405, 0.0
        %v510 = vmax.f32 %v476, 0.0
        %v511 = vmax.f32 %v478, 0.0
        %v512 = vld [vmem:[%s2] sm:$0xf]
        %v513 = vld [vmem:[%s2 + $0x4] sm:$0xf]
        %v514 = vld [vmem:[%s2 + $0x8] sm:$0xf]
        %v515 = vld [vmem:[%s2 + $0xc] sm:$0xf]
        %v516 = vld [vmem:[%s2 + $0x10] sm:$0xf]
        %v517 = vld [vmem:[%s2 + $0x14] sm:$0xf]
        %v518 = vld [vmem:[%s2 + $0x18] sm:$0xf]
        %v519 = vld [vmem:[%s2 + $0x1c] sm:$0xf]
        %v520 = vpack.c.bf16 %v484, %v480
        %v521 = vpack.c.bf16 %v485, %v481
        %v522 = vpack.c.bf16 %v486, %v482
        %v523 = vpack.c.bf16 %v487, %v483
        %v524 = vpack.c.bf16 %v492, %v488
        %v525 = vpack.c.bf16 %v493, %v489
        %v526 = vpack.c.bf16 %v494, %v490
        %v527 = vpack.c.bf16 %v495, %v491
        %v528 = vpack.c.bf16 %v500, %v496
        %v529 = vpack.c.bf16 %v501, %v497
        %v530 = vpack.c.bf16 %v502, %v498
        %v531 = vpack.c.bf16 %v503, %v499
        %v532 = vpack.c.bf16 %v508, %v504
        %v533 = vpack.c.bf16 %v509, %v505
        %v534 = vpack.c.bf16 %v510, %v506
        %v535 = vpack.c.bf16 %v511, %v507
        %536 = vset.pattern.permute.xlu0 1
        %537 = vperm.xlu0 %536, %v253
        %v538 = vpop.permute.xlu0 %537
        %540 = vset.pattern.permute.xlu0 1
        %541 = vperm.xlu0 %540, %v254
        %v542 = vpop.permute.xlu0 %541
        %544 = vset.pattern.permute.xlu0 1
        %545 = vperm.xlu0 %544, %v255
        %v546 = vpop.permute.xlu0 %545
        %548 = vset.pattern.permute.xlu0 1
        %549 = vperm.xlu0 %548, %v256
        %v550 = vpop.permute.xlu0 %549
        %552 = vset.pattern.permute.xlu0 1
        %553 = vperm.xlu0 %552, %v257
        %v554 = vpop.permute.xlu0 %553
        %556 = vset.pattern.permute.xlu0 1
        %557 = vperm.xlu0 %556, %v258
        %v558 = vpop.permute.xlu0 %557
        %560 = vset.pattern.permute.xlu0 1
        %561 = vperm.xlu0 %560, %v259
        %v562 = vpop.permute.xlu0 %561
        %564 = vset.pattern.permute.xlu0 1
        %565 = vperm.xlu0 %564, %v260
        %v566 = vpop.permute.xlu0 %565
        %v576 = vunpack.c.l.b16 %v512
        %v577 = vunpack.c.l.b16 %v513
        %v578 = vunpack.c.l.b16 %v514
        %v579 = vunpack.c.l.b16 %v515
        %v580 = vunpack.c.l.b16 %v516
        %v581 = vunpack.c.l.b16 %v517
        %v582 = vunpack.c.l.b16 %v518
        %v583 = vunpack.c.l.b16 %v519
        %v584 = vpack.c.b16 %v577, %v576
        %v585 = vpack.c.b16 %v579, %v578
        %v586 = vpack.c.b16 %v581, %v580
        %v587 = vpack.c.b16 %v583, %v582
        %vm588 = vcmask 523264
        %v590 = vsel %vm588, %v584, 0
        %v593 = vsel %vm588, %v585, 0
        %v596 = vsel %vm588, %v586, 0
        %v599 = vsel %vm588, %v587, 0
        %601 = vmatprep.subr.bf16.mxu0 0
        %602 = vmatpush1.bf16.msra.mxu0 0
        %603 = vmatprep.subr.bf16.mxu0 0
        %604 = vmatpush1.bf16.msra.mxu0 0
        %605 = vmatprep.subr.bf16.mxu0 0
        %606 = vmatpush1.bf16.msra.mxu0 0
        %607 = vmatprep.subr.bf16.mxu0 0
        %608 = vmatpush1.bf16.msra.mxu0 0
        %609 = vmatprep.subr.bf16.mxu0 %v533
        %610 = vmatpush1.bf16.msra.mxu0 %v532
        %611 = vmatprep.subr.bf16.mxu0 %v529
        %612 = vmatpush1.bf16.msra.mxu0 %v528
        %613 = vmatprep.subr.bf16.mxu0 %v525
        %614 = vmatpush1.bf16.msra.mxu0 %v524
        %615 = vmatprep.subr.bf16.mxu0 %v521
        %616 = vmatpush1.bf16.msra.mxu0 %v520
        %617 = vmatprep.subr.bf16.mxu0 0
        %618 = vmatpush2.bf16.msra.mxu0 0
        %619 = vmatprep.subr.bf16.mxu0 0
        %620 = vmatpush2.bf16.msra.mxu0 0
        %621 = vmatprep.subr.bf16.mxu0 0
        %622 = vmatpush2.bf16.msra.mxu0 0
        %623 = vmatprep.subr.bf16.mxu0 0
        %624 = vmatpush2.bf16.msra.mxu0 0
        %625 = vmatprep.subr.bf16.mxu0 0
        %626 = vmatpush2.bf16.msra.mxu0 0
        %627 = vmatprep.subr.bf16.mxu0 0
        %628 = vmatpush2.bf16.msra.mxu0 0
        %629 = vmatprep.subr.bf16.mxu0 0
        %630 = vmatpush2.bf16.msra.mxu0 0
        %631 = vmatprep.subr.bf16.mxu0 0
        %632 = vmatpush2.bf16.msra.mxu0 0
        %633 = vmatprep.mubr.bf16.mxu0 0
        %634 = vmatmul.mubr.bf16.gmra.mxu0 %v590
        %v635 = vpop.f32.mrf.mxu0
        %v636 = vadd.f32 %v538, %v635
        %v637 = vpop.f32.mrf.mxu0
        %v638 = vadd.f32 %v538, %v637
        %v639 = vpop.f32.mrf.mxu0
        %v640 = vadd.f32 %v542, %v639
        %v641 = vpop.f32.mrf.mxu0
        %v642 = vadd.f32 %v542, %v641
        %643 = vmatprep.mubr.bf16.mxu0 0
        %644 = vmatmul.mubr.bf16.gmra.mxu0 %v593
        %v645 = vpop.f32.mrf.mxu0
        %v646 = vadd.f32 %v546, %v645
        %v647 = vpop.f32.mrf.mxu0
        %v648 = vadd.f32 %v546, %v647
        %v649 = vpop.f32.mrf.mxu0
        %v650 = vadd.f32 %v550, %v649
        %v651 = vpop.f32.mrf.mxu0
        %v652 = vadd.f32 %v550, %v651
        %653 = vmatprep.mubr.bf16.mxu0 0
        %654 = vmatmul.mubr.bf16.gmra.mxu0 %v596
        %v655 = vpop.f32.mrf.mxu0
        %v656 = vadd.f32 %v554, %v655
        %v657 = vpop.f32.mrf.mxu0
        %v658 = vadd.f32 %v554, %v657
        %v659 = vpop.f32.mrf.mxu0
        %v660 = vadd.f32 %v558, %v659
        %v661 = vpop.f32.mrf.mxu0
        %v662 = vadd.f32 %v558, %v661
        %663 = vmatprep.mubr.bf16.mxu0 0
        %664 = vmatmul.mubr.bf16.gmra.mxu0 %v599
        %v665 = vpop.f32.mrf.mxu0
        %v666 = vadd.f32 %v562, %v665
        %v667 = vpop.f32.mrf.mxu0
        %v668 = vadd.f32 %v562, %v667
        %v669 = vpop.f32.mrf.mxu0
        %v670 = vadd.f32 %v566, %v669
        %v671 = vpop.f32.mrf.mxu0
        %v672 = vadd.f32 %v566, %v671
        %673 = vdwg.mxu0
        %674 = vmatprep.subr.bf16.mxu0 0
        %675 = vmatpush1.bf16.msra.mxu0 0
        %676 = vmatprep.subr.bf16.mxu0 0
        %677 = vmatpush1.bf16.msra.mxu0 0
        %678 = vmatprep.subr.bf16.mxu0 0
        %679 = vmatpush1.bf16.msra.mxu0 0
        %680 = vmatprep.subr.bf16.mxu0 0
        %681 = vmatpush1.bf16.msra.mxu0 0
        %682 = vmatprep.subr.bf16.mxu0 %v535
        %683 = vmatpush1.bf16.msra.mxu0 %v534
        %684 = vmatprep.subr.bf16.mxu0 %v531
        %685 = vmatpush1.bf16.msra.mxu0 %v530
        %686 = vmatprep.subr.bf16.mxu0 %v527
        %687 = vmatpush1.bf16.msra.mxu0 %v526
        %688 = vmatprep.subr.bf16.mxu0 %v523
        %689 = vmatpush1.bf16.msra.mxu0 %v522
        %690 = vmatprep.subr.bf16.mxu0 0
        %691 = vmatpush2.bf16.msra.mxu0 0
        %692 = vmatprep.subr.bf16.mxu0 0
        %693 = vmatpush2.bf16.msra.mxu0 0
        %694 = vmatprep.subr.bf16.mxu0 0
        %695 = vmatpush2.bf16.msra.mxu0 0
        %696 = vmatprep.subr.bf16.mxu0 0
        %697 = vmatpush2.bf16.msra.mxu0 0
        %698 = vmatprep.subr.bf16.mxu0 0
        %699 = vmatpush2.bf16.msra.mxu0 0
        %700 = vmatprep.subr.bf16.mxu0 0
        %701 = vmatpush2.bf16.msra.mxu0 0
        %702 = vmatprep.subr.bf16.mxu0 0
        %703 = vmatpush2.bf16.msra.mxu0 0
        %704 = vmatprep.subr.bf16.mxu0 0
        %705 = vmatpush2.bf16.msra.mxu0 0
        %706 = vmatprep.mubr.bf16.mxu0 0
        %707 = vmatmul.mubr.bf16.gmra.mxu0 %v590
        %v708 = vpop.f32.mrf.mxu0
        %v709 = vadd.f32 %v538, %v708
        %v710 = vpop.f32.mrf.mxu0
        %v711 = vadd.f32 %v538, %v710
        %v712 = vpop.f32.mrf.mxu0
        %v713 = vadd.f32 %v542, %v712
        %v714 = vpop.f32.mrf.mxu0
        %v715 = vadd.f32 %v542, %v714
        %716 = vmatprep.mubr.bf16.mxu0 0
        %717 = vmatmul.mubr.bf16.gmra.mxu0 %v593
        %v718 = vpop.f32.mrf.mxu0
        %v719 = vadd.f32 %v546, %v718
        %v720 = vpop.f32.mrf.mxu0
        %v721 = vadd.f32 %v546, %v720
        %v722 = vpop.f32.mrf.mxu0
        %v723 = vadd.f32 %v550, %v722
        %v724 = vpop.f32.mrf.mxu0
        %v725 = vadd.f32 %v550, %v724
        %726 = vmatprep.mubr.bf16.mxu0 0
        %727 = vmatmul.mubr.bf16.gmra.mxu0 %v596
        %v728 = vpop.f32.mrf.mxu0
        %v729 = vadd.f32 %v554, %v728
        %v730 = vpop.f32.mrf.mxu0
        %v731 = vadd.f32 %v554, %v730
        %v732 = vpop.f32.mrf.mxu0
        %v733 = vadd.f32 %v558, %v732
        %v734 = vpop.f32.mrf.mxu0
        %v735 = vadd.f32 %v558, %v734
        %736 = vmatprep.mubr.bf16.mxu0 0
        %737 = vmatmul.mubr.bf16.gmra.mxu0 %v599
        %v738 = vpop.f32.mrf.mxu0
        %v739 = vadd.f32 %v562, %v738
        %v740 = vpop.f32.mrf.mxu0
        %v741 = vadd.f32 %v562, %v740
        %v742 = vpop.f32.mrf.mxu0
        %v743 = vadd.f32 %v566, %v742
        %v744 = vpop.f32.mrf.mxu0
        %v745 = vadd.f32 %v566, %v744
        %746 = vdwg.mxu0
        %v747 = vmax.f32 %v636, 0.0
        %v748 = vmax.f32 %v638, 0.0
        %v749 = vmax.f32 %v709, 0.0
        %v750 = vmax.f32 %v711, 0.0
        %v751 = vmax.f32 %v640, 0.0
        %v752 = vmax.f32 %v642, 0.0
        %v753 = vmax.f32 %v713, 0.0
        %v754 = vmax.f32 %v715, 0.0
        %v755 = vmax.f32 %v646, 0.0
        %v756 = vmax.f32 %v648, 0.0
        %v757 = vmax.f32 %v719, 0.0
        %v758 = vmax.f32 %v721, 0.0
        %v759 = vmax.f32 %v650, 0.0
        %v760 = vmax.f32 %v652, 0.0
        %v761 = vmax.f32 %v723, 0.0
        %v762 = vmax.f32 %v725, 0.0
        %v763 = vmax.f32 %v656, 0.0
        %v764 = vmax.f32 %v658, 0.0
        %v765 = vmax.f32 %v729, 0.0
        %v766 = vmax.f32 %v731, 0.0
        %v767 = vmax.f32 %v660, 0.0
        %v768 = vmax.f32 %v662, 0.0
        %v769 = vmax.f32 %v733, 0.0
        %v770 = vmax.f32 %v735, 0.0
        %v771 = vmax.f32 %v666, 0.0
        %v772 = vmax.f32 %v668, 0.0
        %v773 = vmax.f32 %v739, 0.0
        %v774 = vmax.f32 %v741, 0.0
        %v775 = vmax.f32 %v670, 0.0
        %v776 = vmax.f32 %v672, 0.0
        %v777 = vmax.f32 %v743, 0.0
        %v778 = vmax.f32 %v745, 0.0
        %s779 = scalar_lea.vmem %s2, 32
        %v780 = vld [vmem:[%s779] sm:$0xf]
        %v781 = vld [vmem:[%s779 + $0x4] sm:$0xf]
        %v782 = vld [vmem:[%s779 + $0x8] sm:$0xf]
        %v783 = vld [vmem:[%s779 + $0xc] sm:$0xf]
        %v784 = vld [vmem:[%s779 + $0x10] sm:$0xf]
        %v785 = vld [vmem:[%s779 + $0x14] sm:$0xf]
        %v786 = vld [vmem:[%s779 + $0x18] sm:$0xf]
        %v787 = vld [vmem:[%s779 + $0x1c] sm:$0xf]
        %v788 = vpack.c.bf16 %v751, %v747
        %v789 = vpack.c.bf16 %v752, %v748
        %v790 = vpack.c.bf16 %v753, %v749
        %v791 = vpack.c.bf16 %v754, %v750
        %v792 = vpack.c.bf16 %v759, %v755
        %v793 = vpack.c.bf16 %v760, %v756
        %v794 = vpack.c.bf16 %v761, %v757
        %v795 = vpack.c.bf16 %v762, %v758
        %v796 = vpack.c.bf16 %v767, %v763
        %v797 = vpack.c.bf16 %v768, %v764
        %v798 = vpack.c.bf16 %v769, %v765
        %v799 = vpack.c.bf16 %v770, %v766
        %v800 = vpack.c.bf16 %v775, %v771
        %v801 = vpack.c.bf16 %v776, %v772
        %v802 = vpack.c.bf16 %v777, %v773
        %v803 = vpack.c.bf16 %v778, %v774
        %804 = vset.pattern.permute.xlu0 2
        %805 = vperm.xlu0 %804, %v253
        %v806 = vpop.permute.xlu0 %805
        %808 = vset.pattern.permute.xlu0 2
        %809 = vperm.xlu0 %808, %v254
        %v810 = vpop.permute.xlu0 %809
        %812 = vset.pattern.permute.xlu0 2
        %813 = vperm.xlu0 %812, %v255
        %v814 = vpop.permute.xlu0 %813
        %816 = vset.pattern.permute.xlu0 2
        %817 = vperm.xlu0 %816, %v256
        %v818 = vpop.permute.xlu0 %817
        %820 = vset.pattern.permute.xlu0 2
        %821 = vperm.xlu0 %820, %v257
        %v822 = vpop.permute.xlu0 %821
        %824 = vset.pattern.permute.xlu0 2
        %825 = vperm.xlu0 %824, %v258
        %v826 = vpop.permute.xlu0 %825
        %828 = vset.pattern.permute.xlu0 2
        %829 = vperm.xlu0 %828, %v259
        %v830 = vpop.permute.xlu0 %829
        %832 = vset.pattern.permute.xlu0 2
        %833 = vperm.xlu0 %832, %v260
        %v834 = vpop.permute.xlu0 %833
        %v844 = vunpack.c.l.b16 %v780
        %v845 = vunpack.c.l.b16 %v781
        %v846 = vunpack.c.l.b16 %v782
        %v847 = vunpack.c.l.b16 %v783
        %v848 = vunpack.c.l.b16 %v784
        %v849 = vunpack.c.l.b16 %v785
        %v850 = vunpack.c.l.b16 %v786
        %v851 = vunpack.c.l.b16 %v787
        %v852 = vpack.c.b16 %v845, %v844
        %v853 = vpack.c.b16 %v847, %v846
        %v854 = vpack.c.b16 %v849, %v848
        %v855 = vpack.c.b16 %v851, %v850
        %v857 = vsel %vm588, %v852, 0
        %v860 = vsel %vm588, %v853, 0
        %v863 = vsel %vm588, %v854, 0
        %v866 = vsel %vm588, %v855, 0
        %868 = vmatprep.subr.bf16.mxu0 0
        %869 = vmatpush1.bf16.msra.mxu0 0
        %870 = vmatprep.subr.bf16.mxu0 0
        %871 = vmatpush1.bf16.msra.mxu0 0
        %872 = vmatprep.subr.bf16.mxu0 0
        %873 = vmatpush1.bf16.msra.mxu0 0
        %874 = vmatprep.subr.bf16.mxu0 0
        %875 = vmatpush1.bf16.msra.mxu0 0
        %876 = vmatprep.subr.bf16.mxu0 %v801
        %877 = vmatpush1.bf16.msra.mxu0 %v800
        %878 = vmatprep.subr.bf16.mxu0 %v797
        %879 = vmatpush1.bf16.msra.mxu0 %v796
        %880 = vmatprep.subr.bf16.mxu0 %v793
        %881 = vmatpush1.bf16.msra.mxu0 %v792
        %882 = vmatprep.subr.bf16.mxu0 %v789
        %883 = vmatpush1.bf16.msra.mxu0 %v788
        %884 = vmatprep.subr.bf16.mxu0 0
        %885 = vmatpush2.bf16.msra.mxu0 0
        %886 = vmatprep.subr.bf16.mxu0 0
        %887 = vmatpush2.bf16.msra.mxu0 0
        %888 = vmatprep.subr.bf16.mxu0 0
        %889 = vmatpush2.bf16.msra.mxu0 0
        %890 = vmatprep.subr.bf16.mxu0 0
        %891 = vmatpush2.bf16.msra.mxu0 0
        %892 = vmatprep.subr.bf16.mxu0 0
        %893 = vmatpush2.bf16.msra.mxu0 0
        %894 = vmatprep.subr.bf16.mxu0 0
        %895 = vmatpush2.bf16.msra.mxu0 0
        %896 = vmatprep.subr.bf16.mxu0 0
        %897 = vmatpush2.bf16.msra.mxu0 0
        %898 = vmatprep.subr.bf16.mxu0 0
        %899 = vmatpush2.bf16.msra.mxu0 0
        %900 = vmatprep.mubr.bf16.mxu0 0
        %901 = vmatmul.mubr.bf16.gmra.mxu0 %v857
        %v902 = vpop.f32.mrf.mxu0
        %v903 = vadd.f32 %v806, %v902
        %v904 = vpop.f32.mrf.mxu0
        %v905 = vadd.f32 %v806, %v904
        %v906 = vpop.f32.mrf.mxu0
        %v907 = vadd.f32 %v810, %v906
        %v908 = vpop.f32.mrf.mxu0
        %v909 = vadd.f32 %v810, %v908
        %910 = vmatprep.mubr.bf16.mxu0 0
        %911 = vmatmul.mubr.bf16.gmra.mxu0 %v860
        %v912 = vpop.f32.mrf.mxu0
        %v913 = vadd.f32 %v814, %v912
        %v914 = vpop.f32.mrf.mxu0
        %v915 = vadd.f32 %v814, %v914
        %v916 = vpop.f32.mrf.mxu0
        %v917 = vadd.f32 %v818, %v916
        %v918 = vpop.f32.mrf.mxu0
        %v919 = vadd.f32 %v818, %v918
        %920 = vmatprep.mubr.bf16.mxu0 0
        %921 = vmatmul.mubr.bf16.gmra.mxu0 %v863
        %v922 = vpop.f32.mrf.mxu0
        %v923 = vadd.f32 %v822, %v922
        %v924 = vpop.f32.mrf.mxu0
        %v925 = vadd.f32 %v822, %v924
        %v926 = vpop.f32.mrf.mxu0
        %v927 = vadd.f32 %v826, %v926
        %v928 = vpop.f32.mrf.mxu0
        %v929 = vadd.f32 %v826, %v928
        %930 = vmatprep.mubr.bf16.mxu0 0
        %931 = vmatmul.mubr.bf16.gmra.mxu0 %v866
        %v932 = vpop.f32.mrf.mxu0
        %v933 = vadd.f32 %v830, %v932
        %v934 = vpop.f32.mrf.mxu0
        %v935 = vadd.f32 %v830, %v934
        %v936 = vpop.f32.mrf.mxu0
        %v937 = vadd.f32 %v834, %v936
        %v938 = vpop.f32.mrf.mxu0
        %v939 = vadd.f32 %v834, %v938
        %940 = vdwg.mxu0
        %941 = vmatprep.subr.bf16.mxu0 0
        %942 = vmatpush1.bf16.msra.mxu0 0
        %943 = vmatprep.subr.bf16.mxu0 0
        %944 = vmatpush1.bf16.msra.mxu0 0
        %945 = vmatprep.subr.bf16.mxu0 0
        %946 = vmatpush1.bf16.msra.mxu0 0
        %947 = vmatprep.subr.bf16.mxu0 0
        %948 = vmatpush1.bf16.msra.mxu0 0
        %949 = vmatprep.subr.bf16.mxu0 %v803
        %950 = vmatpush1.bf16.msra.mxu0 %v802
        %951 = vmatprep.subr.bf16.mxu0 %v799
        %952 = vmatpush1.bf16.msra.mxu0 %v798
        %953 = vmatprep.subr.bf16.mxu0 %v795
        %954 = vmatpush1.bf16.msra.mxu0 %v794
        %955 = vmatprep.subr.bf16.mxu0 %v791
        %956 = vmatpush1.bf16.msra.mxu0 %v790
        %957 = vmatprep.subr.bf16.mxu0 0
        %958 = vmatpush2.bf16.msra.mxu0 0
        %959 = vmatprep.subr.bf16.mxu0 0
        %960 = vmatpush2.bf16.msra.mxu0 0
        %961 = vmatprep.subr.bf16.mxu0 0
        %962 = vmatpush2.bf16.msra.mxu0 0
        %963 = vmatprep.subr.bf16.mxu0 0
        %964 = vmatpush2.bf16.msra.mxu0 0
        %965 = vmatprep.subr.bf16.mxu0 0
        %966 = vmatpush2.bf16.msra.mxu0 0
        %967 = vmatprep.subr.bf16.mxu0 0
        %968 = vmatpush2.bf16.msra.mxu0 0
        %969 = vmatprep.subr.bf16.mxu0 0
        %970 = vmatpush2.bf16.msra.mxu0 0
        %971 = vmatprep.subr.bf16.mxu0 0
        %972 = vmatpush2.bf16.msra.mxu0 0
        %973 = vmatprep.mubr.bf16.mxu0 0
        %974 = vmatmul.mubr.bf16.gmra.mxu0 %v857
        %v975 = vpop.f32.mrf.mxu0
        %v976 = vadd.f32 %v806, %v975
        %v977 = vpop.f32.mrf.mxu0
        %v978 = vadd.f32 %v806, %v977
        %v979 = vpop.f32.mrf.mxu0
        %v980 = vadd.f32 %v810, %v979
        %v981 = vpop.f32.mrf.mxu0
        %v982 = vadd.f32 %v810, %v981
        %983 = vmatprep.mubr.bf16.mxu0 0
        %984 = vmatmul.mubr.bf16.gmra.mxu0 %v860
        %v985 = vpop.f32.mrf.mxu0
        %v986 = vadd.f32 %v814, %v985
        %v987 = vpop.f32.mrf.mxu0
        %v988 = vadd.f32 %v814, %v987
        %v989 = vpop.f32.mrf.mxu0
        %v990 = vadd.f32 %v818, %v989
        %v991 = vpop.f32.mrf.mxu0
        %v992 = vadd.f32 %v818, %v991
        %993 = vmatprep.mubr.bf16.mxu0 0
        %994 = vmatmul.mubr.bf16.gmra.mxu0 %v863
        %v995 = vpop.f32.mrf.mxu0
        %v996 = vadd.f32 %v822, %v995
        %v997 = vpop.f32.mrf.mxu0
        %v998 = vadd.f32 %v822, %v997
        %v999 = vpop.f32.mrf.mxu0
        %v1000 = vadd.f32 %v826, %v999
        %v1001 = vpop.f32.mrf.mxu0
        %v1002 = vadd.f32 %v826, %v1001
        %1003 = vmatprep.mubr.bf16.mxu0 0
        %1004 = vmatmul.mubr.bf16.gmra.mxu0 %v866
        %v1005 = vpop.f32.mrf.mxu0
        %v1006 = vadd.f32 %v830, %v1005
        %v1007 = vpop.f32.mrf.mxu0
        %v1008 = vadd.f32 %v830, %v1007
        %v1009 = vpop.f32.mrf.mxu0
        %v1010 = vadd.f32 %v834, %v1009
        %v1011 = vpop.f32.mrf.mxu0
        %v1012 = vadd.f32 %v834, %v1011
        %1013 = vdwg.mxu0
        %v1014 = vmax.f32 %v903, 0.0
        %v1015 = vmax.f32 %v905, 0.0
        %v1016 = vmax.f32 %v976, 0.0
        %v1017 = vmax.f32 %v978, 0.0
        %v1018 = vmax.f32 %v907, 0.0
        %v1019 = vmax.f32 %v909, 0.0
        %v1020 = vmax.f32 %v980, 0.0
        %v1021 = vmax.f32 %v982, 0.0
        %v1022 = vmax.f32 %v913, 0.0
        %v1023 = vmax.f32 %v915, 0.0
        %v1024 = vmax.f32 %v986, 0.0
        %v1025 = vmax.f32 %v988, 0.0
        %v1026 = vmax.f32 %v917, 0.0
        %v1027 = vmax.f32 %v919, 0.0
        %v1028 = vmax.f32 %v990, 0.0
        %v1029 = vmax.f32 %v992, 0.0
        %v1030 = vmax.f32 %v923, 0.0
        %v1031 = vmax.f32 %v925, 0.0
        %v1032 = vmax.f32 %v996, 0.0
        %v1033 = vmax.f32 %v998, 0.0
        %v1034 = vmax.f32 %v927, 0.0
        %v1035 = vmax.f32 %v929, 0.0
        %v1036 = vmax.f32 %v1000, 0.0
        %v1037 = vmax.f32 %v1002, 0.0
        %v1038 = vmax.f32 %v933, 0.0
        %v1039 = vmax.f32 %v935, 0.0
        %v1040 = vmax.f32 %v1006, 0.0
        %v1041 = vmax.f32 %v1008, 0.0
        %v1042 = vmax.f32 %v937, 0.0
        %v1043 = vmax.f32 %v939, 0.0
        %v1044 = vmax.f32 %v1010, 0.0
        %v1045 = vmax.f32 %v1012, 0.0
        %s1046 = scalar_lea.vmem %s2, 64
        %v1047 = vld [vmem:[%s1046] sm:$0xf]
        %v1048 = vld [vmem:[%s1046 + $0x4] sm:$0xf]
        %v1049 = vld [vmem:[%s1046 + $0x8] sm:$0xf]
        %v1050 = vld [vmem:[%s1046 + $0xc] sm:$0xf]
        %v1051 = vld [vmem:[%s1046 + $0x10] sm:$0xf]
        %v1052 = vld [vmem:[%s1046 + $0x14] sm:$0xf]
        %v1053 = vld [vmem:[%s1046 + $0x18] sm:$0xf]
        %v1054 = vld [vmem:[%s1046 + $0x1c] sm:$0xf]
        %v1055 = vpack.c.bf16 %v1018, %v1014
        %v1056 = vpack.c.bf16 %v1019, %v1015
        %v1057 = vpack.c.bf16 %v1020, %v1016
        %v1058 = vpack.c.bf16 %v1021, %v1017
        %v1059 = vpack.c.bf16 %v1026, %v1022
        %v1060 = vpack.c.bf16 %v1027, %v1023
        %v1061 = vpack.c.bf16 %v1028, %v1024
        %v1062 = vpack.c.bf16 %v1029, %v1025
        %v1063 = vpack.c.bf16 %v1034, %v1030
        %v1064 = vpack.c.bf16 %v1035, %v1031
        %v1065 = vpack.c.bf16 %v1036, %v1032
        %v1066 = vpack.c.bf16 %v1037, %v1033
        %v1067 = vpack.c.bf16 %v1042, %v1038
        %v1068 = vpack.c.bf16 %v1043, %v1039
        %v1069 = vpack.c.bf16 %v1044, %v1040
        %v1070 = vpack.c.bf16 %v1045, %v1041
        %s1071 = scalar_lea.vmem %s1, 32
        %v1072 = vld [vmem:[%s1071] sm:$0xf]
        %v1073 = vld [vmem:[%s1071 + $0x4] sm:$0xf]
        %v1074 = vld [vmem:[%s1071 + $0x8] sm:$0xf]
        %v1075 = vld [vmem:[%s1071 + $0xc] sm:$0xf]
        %v1076 = vld [vmem:[%s1071 + $0x10] sm:$0xf]
        %v1077 = vld [vmem:[%s1071 + $0x14] sm:$0xf]
        %v1078 = vld [vmem:[%s1071 + $0x18] sm:$0xf]
        %v1079 = vld [vmem:[%s1071 + $0x1c] sm:$0xf]
        %v1088 = vunpack.c.l.b16 %v1072
        %v1089 = vunpack.c.l.b16 %v1073
        %v1090 = vunpack.c.l.b16 %v1074
        %v1091 = vunpack.c.l.b16 %v1075
        %v1092 = vunpack.c.l.b16 %v1076
        %v1093 = vunpack.c.l.b16 %v1077
        %v1094 = vunpack.c.l.b16 %v1078
        %v1095 = vunpack.c.l.b16 %v1079
        %v1096 = vpack.c.b16 %v1089, %v1088
        %v1097 = vpack.c.b16 %v1091, %v1090
        %v1098 = vpack.c.b16 %v1093, %v1092
        %v1099 = vpack.c.b16 %v1095, %v1094
        %v1101 = vsel %vm321, %v1096, 0
        %v1104 = vsel %vm321, %v1097, 0
        %v1107 = vsel %vm321, %v1098, 0
        %v1110 = vsel %vm321, %v1099, 0
        %1112 = vmatprep.subr.bf16.mxu0 0
        %1113 = vmatpush1.bf16.msra.mxu0 0
        %1114 = vmatprep.subr.bf16.mxu0 0
        %1115 = vmatpush1.bf16.msra.mxu0 0
        %1116 = vmatprep.subr.bf16.mxu0 0
        %1117 = vmatpush1.bf16.msra.mxu0 0
        %1118 = vmatprep.subr.bf16.mxu0 0
        %1119 = vmatpush1.bf16.msra.mxu0 0
        %1120 = vmatprep.subr.bf16.mxu0 0
        %1121 = vmatpush1.bf16.msra.mxu0 0
        %1122 = vmatprep.subr.bf16.mxu0 0
        %1123 = vmatpush1.bf16.msra.mxu0 0
        %1124 = vmatprep.subr.bf16.mxu0 0
        %1125 = vmatpush1.bf16.msra.mxu0 0
        %1126 = vmatprep.subr.bf16.mxu0 %v242
        %1127 = vmatpush1.bf16.msra.mxu0 %v241
        %1128 = vmatprep.subr.bf16.mxu0 0
        %1129 = vmatpush2.bf16.msra.mxu0 0
        %1130 = vmatprep.subr.bf16.mxu0 0
        %1131 = vmatpush2.bf16.msra.mxu0 0
        %1132 = vmatprep.subr.bf16.mxu0 0
        %1133 = vmatpush2.bf16.msra.mxu0 0
        %1134 = vmatprep.subr.bf16.mxu0 0
        %1135 = vmatpush2.bf16.msra.mxu0 0
        %1136 = vmatprep.subr.bf16.mxu0 0
        %1137 = vmatpush2.bf16.msra.mxu0 0
        %1138 = vmatprep.subr.bf16.mxu0 0
        %1139 = vmatpush2.bf16.msra.mxu0 0
        %1140 = vmatprep.subr.bf16.mxu0 0
        %1141 = vmatpush2.bf16.msra.mxu0 0
        %1142 = vmatprep.subr.bf16.mxu0 0
        %1143 = vmatpush2.bf16.msra.mxu0 0
        %1144 = vmatprep.mubr.bf16.mxu0 0
        %1145 = vmatmul.mubr.bf16.gmra.mxu0 %v1101
        %v1146 = vpop.f32.mrf.mxu0
        %v1147 = vadd.f32 0.0, %v1146
        %v1148 = vpop.f32.mrf.mxu0
        %v1149 = vadd.f32 0.0, %v1148
        %v1150 = vpop.f32.mrf.mxu0
        %v1151 = vadd.f32 0.0, %v1150
        %v1152 = vpop.f32.mrf.mxu0
        %v1153 = vadd.f32 0.0, %v1152
        %1154 = vmatprep.mubr.bf16.mxu0 0
        %1155 = vmatmul.mubr.bf16.gmra.mxu0 %v1104
        %v1156 = vpop.f32.mrf.mxu0
        %v1157 = vadd.f32 0.0, %v1156
        %v1158 = vpop.f32.mrf.mxu0
        %v1159 = vadd.f32 0.0, %v1158
        %v1160 = vpop.f32.mrf.mxu0
        %v1161 = vadd.f32 0.0, %v1160
        %v1162 = vpop.f32.mrf.mxu0
        %v1163 = vadd.f32 0.0, %v1162
        %1164 = vmatprep.mubr.bf16.mxu0 0
        %1165 = vmatmul.mubr.bf16.gmra.mxu0 %v1107
        %v1166 = vpop.f32.mrf.mxu0
        %v1167 = vadd.f32 0.0, %v1166
        %v1168 = vpop.f32.mrf.mxu0
        %v1169 = vadd.f32 0.0, %v1168
        %v1170 = vpop.f32.mrf.mxu0
        %v1171 = vadd.f32 0.0, %v1170
        %v1172 = vpop.f32.mrf.mxu0
        %v1173 = vadd.f32 0.0, %v1172
        %1174 = vmatprep.mubr.bf16.mxu0 0
        %1175 = vmatmul.mubr.bf16.gmra.mxu0 %v1110
        %v1176 = vpop.f32.mrf.mxu0
        %v1177 = vadd.f32 0.0, %v1176
        %v1178 = vpop.f32.mrf.mxu0
        %v1179 = vadd.f32 0.0, %v1178
        %v1180 = vpop.f32.mrf.mxu0
        %v1181 = vadd.f32 0.0, %v1180
        %v1182 = vpop.f32.mrf.mxu0
        %v1183 = vadd.f32 0.0, %v1182
        %1184 = vdwg.mxu0
        %1185 = vmatprep.subr.bf16.mxu0 0
        %1186 = vmatpush1.bf16.msra.mxu0 0
        %1187 = vmatprep.subr.bf16.mxu0 0
        %1188 = vmatpush1.bf16.msra.mxu0 0
        %1189 = vmatprep.subr.bf16.mxu0 0
        %1190 = vmatpush1.bf16.msra.mxu0 0
        %1191 = vmatprep.subr.bf16.mxu0 0
        %1192 = vmatpush1.bf16.msra.mxu0 0
        %1193 = vmatprep.subr.bf16.mxu0 0
        %1194 = vmatpush1.bf16.msra.mxu0 0
        %1195 = vmatprep.subr.bf16.mxu0 0
        %1196 = vmatpush1.bf16.msra.mxu0 0
        %1197 = vmatprep.subr.bf16.mxu0 0
        %1198 = vmatpush1.bf16.msra.mxu0 0
        %1199 = vmatprep.subr.bf16.mxu0 %v244
        %1200 = vmatpush1.bf16.msra.mxu0 %v243
        %1201 = vmatprep.subr.bf16.mxu0 0
        %1202 = vmatpush2.bf16.msra.mxu0 0
        %1203 = vmatprep.subr.bf16.mxu0 0
        %1204 = vmatpush2.bf16.msra.mxu0 0
        %1205 = vmatprep.subr.bf16.mxu0 0
        %1206 = vmatpush2.bf16.msra.mxu0 0
        %1207 = vmatprep.subr.bf16.mxu0 0
        %1208 = vmatpush2.bf16.msra.mxu0 0
        %1209 = vmatprep.subr.bf16.mxu0 0
        %1210 = vmatpush2.bf16.msra.mxu0 0
        %1211 = vmatprep.subr.bf16.mxu0 0
        %1212 = vmatpush2.bf16.msra.mxu0 0
        %1213 = vmatprep.subr.bf16.mxu0 0
        %1214 = vmatpush2.bf16.msra.mxu0 0
        %1215 = vmatprep.subr.bf16.mxu0 0
        %1216 = vmatpush2.bf16.msra.mxu0 0
        %1217 = vmatprep.mubr.bf16.mxu0 0
        %1218 = vmatmul.mubr.bf16.gmra.mxu0 %v1101
        %v1219 = vpop.f32.mrf.mxu0
        %v1220 = vadd.f32 0.0, %v1219
        %v1221 = vpop.f32.mrf.mxu0
        %v1222 = vadd.f32 0.0, %v1221
        %v1223 = vpop.f32.mrf.mxu0
        %v1224 = vadd.f32 0.0, %v1223
        %v1225 = vpop.f32.mrf.mxu0
        %v1226 = vadd.f32 0.0, %v1225
        %1227 = vmatprep.mubr.bf16.mxu0 0
        %1228 = vmatmul.mubr.bf16.gmra.mxu0 %v1104
        %v1229 = vpop.f32.mrf.mxu0
        %v1230 = vadd.f32 0.0, %v1229
        %v1231 = vpop.f32.mrf.mxu0
        %v1232 = vadd.f32 0.0, %v1231
        %v1233 = vpop.f32.mrf.mxu0
        %v1234 = vadd.f32 0.0, %v1233
        %v1235 = vpop.f32.mrf.mxu0
        %v1236 = vadd.f32 0.0, %v1235
        %1237 = vmatprep.mubr.bf16.mxu0 0
        %1238 = vmatmul.mubr.bf16.gmra.mxu0 %v1107
        %v1239 = vpop.f32.mrf.mxu0
        %v1240 = vadd.f32 0.0, %v1239
        %v1241 = vpop.f32.mrf.mxu0
        %v1242 = vadd.f32 0.0, %v1241
        %v1243 = vpop.f32.mrf.mxu0
        %v1244 = vadd.f32 0.0, %v1243
        %v1245 = vpop.f32.mrf.mxu0
        %v1246 = vadd.f32 0.0, %v1245
        %1247 = vmatprep.mubr.bf16.mxu0 0
        %1248 = vmatmul.mubr.bf16.gmra.mxu0 %v1110
        %v1249 = vpop.f32.mrf.mxu0
        %v1250 = vadd.f32 0.0, %v1249
        %v1251 = vpop.f32.mrf.mxu0
        %v1252 = vadd.f32 0.0, %v1251
        %v1253 = vpop.f32.mrf.mxu0
        %v1254 = vadd.f32 0.0, %v1253
        %v1255 = vpop.f32.mrf.mxu0
        %v1256 = vadd.f32 0.0, %v1255
        %1257 = vdwg.mxu0
        %v1266 = vunpack.c.l.b16 %v1047
        %v1267 = vunpack.c.l.b16 %v1048
        %v1268 = vunpack.c.l.b16 %v1049
        %v1269 = vunpack.c.l.b16 %v1050
        %v1270 = vunpack.c.l.b16 %v1051
        %v1271 = vunpack.c.l.b16 %v1052
        %v1272 = vunpack.c.l.b16 %v1053
        %v1273 = vunpack.c.l.b16 %v1054
        %v1274 = vpack.c.b16 %v1267, %v1266
        %v1275 = vpack.c.b16 %v1269, %v1268
        %v1276 = vpack.c.b16 %v1271, %v1270
        %v1277 = vpack.c.b16 %v1273, %v1272
        %v1279 = vsel %vm588, %v1274, 0
        %v1282 = vsel %vm588, %v1275, 0
        %v1285 = vsel %vm588, %v1276, 0
        %v1288 = vsel %vm588, %v1277, 0
        %1290 = vmatprep.subr.bf16.mxu0 0
        %1291 = vmatpush1.bf16.msra.mxu0 0
        %1292 = vmatprep.subr.bf16.mxu0 0
        %1293 = vmatpush1.bf16.msra.mxu0 0
        %1294 = vmatprep.subr.bf16.mxu0 0
        %1295 = vmatpush1.bf16.msra.mxu0 0
        %1296 = vmatprep.subr.bf16.mxu0 0
        %1297 = vmatpush1.bf16.msra.mxu0 0
        %1298 = vmatprep.subr.bf16.mxu0 %v1068
        %1299 = vmatpush1.bf16.msra.mxu0 %v1067
        %1300 = vmatprep.subr.bf16.mxu0 %v1064
        %1301 = vmatpush1.bf16.msra.mxu0 %v1063
        %1302 = vmatprep.subr.bf16.mxu0 %v1060
        %1303 = vmatpush1.bf16.msra.mxu0 %v1059
        %1304 = vmatprep.subr.bf16.mxu0 %v1056
        %1305 = vmatpush1.bf16.msra.mxu0 %v1055
        %1306 = vmatprep.subr.bf16.mxu0 0
        %1307 = vmatpush2.bf16.msra.mxu0 0
        %1308 = vmatprep.subr.bf16.mxu0 0
        %1309 = vmatpush2.bf16.msra.mxu0 0
        %1310 = vmatprep.subr.bf16.mxu0 0
        %1311 = vmatpush2.bf16.msra.mxu0 0
        %1312 = vmatprep.subr.bf16.mxu0 0
        %1313 = vmatpush2.bf16.msra.mxu0 0
        %1314 = vmatprep.subr.bf16.mxu0 0
        %1315 = vmatpush2.bf16.msra.mxu0 0
        %1316 = vmatprep.subr.bf16.mxu0 0
        %1317 = vmatpush2.bf16.msra.mxu0 0
        %1318 = vmatprep.subr.bf16.mxu0 0
        %1319 = vmatpush2.bf16.msra.mxu0 0
        %1320 = vmatprep.subr.bf16.mxu0 0
        %1321 = vmatpush2.bf16.msra.mxu0 0
        %1322 = vmatprep.mubr.bf16.mxu0 0
        %1323 = vmatmul.mubr.bf16.gmra.mxu0 %v1279
        %v1324 = vpop.f32.mrf.mxu0
        %v1325 = vadd.f32 %v1147, %v1324
        %v1326 = vpop.f32.mrf.mxu0
        %v1327 = vadd.f32 %v1149, %v1326
        %v1328 = vpop.f32.mrf.mxu0
        %v1329 = vadd.f32 %v1151, %v1328
        %v1330 = vpop.f32.mrf.mxu0
        %v1331 = vadd.f32 %v1153, %v1330
        %1332 = vmatprep.mubr.bf16.mxu0 0
        %1333 = vmatmul.mubr.bf16.gmra.mxu0 %v1282
        %v1334 = vpop.f32.mrf.mxu0
        %v1335 = vadd.f32 %v1157, %v1334
        %v1336 = vpop.f32.mrf.mxu0
        %v1337 = vadd.f32 %v1159, %v1336
        %v1338 = vpop.f32.mrf.mxu0
        %v1339 = vadd.f32 %v1161, %v1338
        %v1340 = vpop.f32.mrf.mxu0
        %v1341 = vadd.f32 %v1163, %v1340
        %1342 = vmatprep.mubr.bf16.mxu0 0
        %1343 = vmatmul.mubr.bf16.gmra.mxu0 %v1285
        %v1344 = vpop.f32.mrf.mxu0
        %v1345 = vadd.f32 %v1167, %v1344
        %v1346 = vpop.f32.mrf.mxu0
        %v1347 = vadd.f32 %v1169, %v1346
        %v1348 = vpop.f32.mrf.mxu0
        %v1349 = vadd.f32 %v1171, %v1348
        %v1350 = vpop.f32.mrf.mxu0
        %v1351 = vadd.f32 %v1173, %v1350
        %1352 = vmatprep.mubr.bf16.mxu0 0
        %1353 = vmatmul.mubr.bf16.gmra.mxu0 %v1288
        %v1354 = vpop.f32.mrf.mxu0
        %v1355 = vadd.f32 %v1177, %v1354
        %v1356 = vpop.f32.mrf.mxu0
        %v1357 = vadd.f32 %v1179, %v1356
        %v1358 = vpop.f32.mrf.mxu0
        %v1359 = vadd.f32 %v1181, %v1358
        %v1360 = vpop.f32.mrf.mxu0
        %v1361 = vadd.f32 %v1183, %v1360
        %1362 = vdwg.mxu0
        %1363 = vmatprep.subr.bf16.mxu0 0
        %1364 = vmatpush1.bf16.msra.mxu0 0
        %1365 = vmatprep.subr.bf16.mxu0 0
        %1366 = vmatpush1.bf16.msra.mxu0 0
        %1367 = vmatprep.subr.bf16.mxu0 0
        %1368 = vmatpush1.bf16.msra.mxu0 0
        %1369 = vmatprep.subr.bf16.mxu0 0
        %1370 = vmatpush1.bf16.msra.mxu0 0
        %1371 = vmatprep.subr.bf16.mxu0 %v1070
        %1372 = vmatpush1.bf16.msra.mxu0 %v1069
        %1373 = vmatprep.subr.bf16.mxu0 %v1066
        %1374 = vmatpush1.bf16.msra.mxu0 %v1065
        %1375 = vmatprep.subr.bf16.mxu0 %v1062
        %1376 = vmatpush1.bf16.msra.mxu0 %v1061
        %1377 = vmatprep.subr.bf16.mxu0 %v1058
        %1378 = vmatpush1.bf16.msra.mxu0 %v1057
        %1379 = vmatprep.subr.bf16.mxu0 0
        %1380 = vmatpush2.bf16.msra.mxu0 0
        %1381 = vmatprep.subr.bf16.mxu0 0
        %1382 = vmatpush2.bf16.msra.mxu0 0
        %1383 = vmatprep.subr.bf16.mxu0 0
        %1384 = vmatpush2.bf16.msra.mxu0 0
        %1385 = vmatprep.subr.bf16.mxu0 0
        %1386 = vmatpush2.bf16.msra.mxu0 0
        %1387 = vmatprep.subr.bf16.mxu0 0
        %1388 = vmatpush2.bf16.msra.mxu0 0
        %1389 = vmatprep.subr.bf16.mxu0 0
        %1390 = vmatpush2.bf16.msra.mxu0 0
        %1391 = vmatprep.subr.bf16.mxu0 0
        %1392 = vmatpush2.bf16.msra.mxu0 0
        %1393 = vmatprep.subr.bf16.mxu0 0
        %1394 = vmatpush2.bf16.msra.mxu0 0
        %1395 = vmatprep.mubr.bf16.mxu0 0
        %1396 = vmatmul.mubr.bf16.gmra.mxu0 %v1279
        %v1397 = vpop.f32.mrf.mxu0
        %v1398 = vadd.f32 %v1220, %v1397
        %v1399 = vpop.f32.mrf.mxu0
        %v1400 = vadd.f32 %v1222, %v1399
        %v1401 = vpop.f32.mrf.mxu0
        %v1402 = vadd.f32 %v1224, %v1401
        %v1403 = vpop.f32.mrf.mxu0
        %v1404 = vadd.f32 %v1226, %v1403
        %1405 = vmatprep.mubr.bf16.mxu0 0
        %1406 = vmatmul.mubr.bf16.gmra.mxu0 %v1282
        %v1407 = vpop.f32.mrf.mxu0
        %v1408 = vadd.f32 %v1230, %v1407
        %v1409 = vpop.f32.mrf.mxu0
        %v1410 = vadd.f32 %v1232, %v1409
        %v1411 = vpop.f32.mrf.mxu0
        %v1412 = vadd.f32 %v1234, %v1411
        %v1413 = vpop.f32.mrf.mxu0
        %v1414 = vadd.f32 %v1236, %v1413
        %1415 = vmatprep.mubr.bf16.mxu0 0
        %1416 = vmatmul.mubr.bf16.gmra.mxu0 %v1285
        %v1417 = vpop.f32.mrf.mxu0
        %v1418 = vadd.f32 %v1240, %v1417
        %v1419 = vpop.f32.mrf.mxu0
        %v1420 = vadd.f32 %v1242, %v1419
        %v1421 = vpop.f32.mrf.mxu0
        %v1422 = vadd.f32 %v1244, %v1421
        %v1423 = vpop.f32.mrf.mxu0
        %v1424 = vadd.f32 %v1246, %v1423
        %1425 = vmatprep.mubr.bf16.mxu0 0
        %1426 = vmatmul.mubr.bf16.gmra.mxu0 %v1288
        %v1427 = vpop.f32.mrf.mxu0
        %v1428 = vadd.f32 %v1250, %v1427
        %v1429 = vpop.f32.mrf.mxu0
        %v1430 = vadd.f32 %v1252, %v1429
        %v1431 = vpop.f32.mrf.mxu0
        %v1432 = vadd.f32 %v1254, %v1431
        %v1433 = vpop.f32.mrf.mxu0
        %v1434 = vadd.f32 %v1256, %v1433
        %1435 = vdwg.mxu0
        %1436 = vset.pattern.permute.xlu0 3
        %1437 = vperm.xlu0 %1436, %v253
        %v1438 = vpop.permute.xlu0 %1437
        %1440 = vset.pattern.permute.xlu0 3
        %1441 = vperm.xlu0 %1440, %v254
        %v1442 = vpop.permute.xlu0 %1441
        %1444 = vset.pattern.permute.xlu0 3
        %1445 = vperm.xlu0 %1444, %v255
        %v1446 = vpop.permute.xlu0 %1445
        %1448 = vset.pattern.permute.xlu0 3
        %1449 = vperm.xlu0 %1448, %v256
        %v1450 = vpop.permute.xlu0 %1449
        %1452 = vset.pattern.permute.xlu0 3
        %1453 = vperm.xlu0 %1452, %v257
        %v1454 = vpop.permute.xlu0 %1453
        %1456 = vset.pattern.permute.xlu0 3
        %1457 = vperm.xlu0 %1456, %v258
        %v1458 = vpop.permute.xlu0 %1457
        %1460 = vset.pattern.permute.xlu0 3
        %1461 = vperm.xlu0 %1460, %v259
        %v1462 = vpop.permute.xlu0 %1461
        %1464 = vset.pattern.permute.xlu0 3
        %1465 = vperm.xlu0 %1464, %v260
        %v1466 = vpop.permute.xlu0 %1465
        %v1468 = vadd.f32 %v1325, %v1438
        %v1469 = vadd.f32 %v1327, %v1438
        %v1470 = vadd.f32 %v1398, %v1438
        %v1471 = vadd.f32 %v1400, %v1438
        %v1472 = vadd.f32 %v1329, %v1442
        %v1473 = vadd.f32 %v1331, %v1442
        %v1474 = vadd.f32 %v1402, %v1442
        %v1475 = vadd.f32 %v1404, %v1442
        %v1476 = vadd.f32 %v1335, %v1446
        %v1477 = vadd.f32 %v1337, %v1446
        %v1478 = vadd.f32 %v1408, %v1446
        %v1479 = vadd.f32 %v1410, %v1446
        %v1480 = vadd.f32 %v1339, %v1450
        %v1481 = vadd.f32 %v1341, %v1450
        %v1482 = vadd.f32 %v1412, %v1450
        %v1483 = vadd.f32 %v1414, %v1450
        %v1484 = vadd.f32 %v1345, %v1454
        %v1485 = vadd.f32 %v1347, %v1454
        %v1486 = vadd.f32 %v1418, %v1454
        %v1487 = vadd.f32 %v1420, %v1454
        %v1488 = vadd.f32 %v1349, %v1458
        %v1489 = vadd.f32 %v1351, %v1458
        %v1490 = vadd.f32 %v1422, %v1458
        %v1491 = vadd.f32 %v1424, %v1458
        %v1492 = vadd.f32 %v1355, %v1462
        %v1493 = vadd.f32 %v1357, %v1462
        %v1494 = vadd.f32 %v1428, %v1462
        %v1495 = vadd.f32 %v1430, %v1462
        %v1496 = vadd.f32 %v1359, %v1466
        %v1497 = vadd.f32 %v1361, %v1466
        %v1498 = vadd.f32 %v1432, %v1466
        %v1499 = vadd.f32 %v1434, %v1466
        %v1500 = vmax.f32 %v1468, 0.0
        %v1501 = vmax.f32 %v1469, 0.0
        %v1502 = vmax.f32 %v1470, 0.0
        %v1503 = vmax.f32 %v1471, 0.0
        %v1504 = vmax.f32 %v1472, 0.0
        %v1505 = vmax.f32 %v1473, 0.0
        %v1506 = vmax.f32 %v1474, 0.0
        %v1507 = vmax.f32 %v1475, 0.0
        %v1508 = vmax.f32 %v1476, 0.0
        %v1509 = vmax.f32 %v1477, 0.0
        %v1510 = vmax.f32 %v1478, 0.0
        %v1511 = vmax.f32 %v1479, 0.0
        %v1512 = vmax.f32 %v1480, 0.0
        %v1513 = vmax.f32 %v1481, 0.0
        %v1514 = vmax.f32 %v1482, 0.0
        %v1515 = vmax.f32 %v1483, 0.0
        %v1516 = vmax.f32 %v1484, 0.0
        %v1517 = vmax.f32 %v1485, 0.0
        %v1518 = vmax.f32 %v1486, 0.0
        %v1519 = vmax.f32 %v1487, 0.0
        %v1520 = vmax.f32 %v1488, 0.0
        %v1521 = vmax.f32 %v1489, 0.0
        %v1522 = vmax.f32 %v1490, 0.0
        %v1523 = vmax.f32 %v1491, 0.0
        %v1524 = vmax.f32 %v1492, 0.0
        %v1525 = vmax.f32 %v1493, 0.0
        %v1526 = vmax.f32 %v1494, 0.0
        %v1527 = vmax.f32 %v1495, 0.0
        %v1528 = vmax.f32 %v1496, 0.0
        %v1529 = vmax.f32 %v1497, 0.0
        %v1530 = vmax.f32 %v1498, 0.0
        %v1531 = vmax.f32 %v1499, 0.0
        %s1532 = scalar_lea.vmem %s2, 96
        %v1533 = vld [vmem:[%s1532] sm:$0xf]
        %v1534 = vld [vmem:[%s1532 + $0x4] sm:$0xf]
        %v1535 = vld [vmem:[%s1532 + $0x8] sm:$0xf]
        %v1536 = vld [vmem:[%s1532 + $0xc] sm:$0xf]
        %v1537 = vld [vmem:[%s1532 + $0x10] sm:$0xf]
        %v1538 = vld [vmem:[%s1532 + $0x14] sm:$0xf]
        %v1539 = vld [vmem:[%s1532 + $0x18] sm:$0xf]
        %v1540 = vld [vmem:[%s1532 + $0x1c] sm:$0xf]
        %v1541 = vpack.c.bf16 %v1504, %v1500
        %v1542 = vpack.c.bf16 %v1505, %v1501
        %v1543 = vpack.c.bf16 %v1506, %v1502
        %v1544 = vpack.c.bf16 %v1507, %v1503
        %v1545 = vpack.c.bf16 %v1512, %v1508
        %v1546 = vpack.c.bf16 %v1513, %v1509
        %v1547 = vpack.c.bf16 %v1514, %v1510
        %v1548 = vpack.c.bf16 %v1515, %v1511
        %v1549 = vpack.c.bf16 %v1520, %v1516
        %v1550 = vpack.c.bf16 %v1521, %v1517
        %v1551 = vpack.c.bf16 %v1522, %v1518
        %v1552 = vpack.c.bf16 %v1523, %v1519
        %v1553 = vpack.c.bf16 %v1528, %v1524
        %v1554 = vpack.c.bf16 %v1529, %v1525
        %v1555 = vpack.c.bf16 %v1530, %v1526
        %v1556 = vpack.c.bf16 %v1531, %v1527
        %1557 = vset.pattern.permute.xlu0 4
        %1558 = vperm.xlu0 %1557, %v253
        %v1559 = vpop.permute.xlu0 %1558
        %1561 = vset.pattern.permute.xlu0 4
        %1562 = vperm.xlu0 %1561, %v254
        %v1563 = vpop.permute.xlu0 %1562
        %1565 = vset.pattern.permute.xlu0 4
        %1566 = vperm.xlu0 %1565, %v255
        %v1567 = vpop.permute.xlu0 %1566
        %1569 = vset.pattern.permute.xlu0 4
        %1570 = vperm.xlu0 %1569, %v256
        %v1571 = vpop.permute.xlu0 %1570
        %1573 = vset.pattern.permute.xlu0 4
        %1574 = vperm.xlu0 %1573, %v257
        %v1575 = vpop.permute.xlu0 %1574
        %1577 = vset.pattern.permute.xlu0 4
        %1578 = vperm.xlu0 %1577, %v258
        %v1579 = vpop.permute.xlu0 %1578
        %1581 = vset.pattern.permute.xlu0 4
        %1582 = vperm.xlu0 %1581, %v259
        %v1583 = vpop.permute.xlu0 %1582
        %1585 = vset.pattern.permute.xlu0 4
        %1586 = vperm.xlu0 %1585, %v260
        %v1587 = vpop.permute.xlu0 %1586
        %v1597 = vunpack.c.l.b16 %v1533
        %v1598 = vunpack.c.l.b16 %v1534
        %v1599 = vunpack.c.l.b16 %v1535
        %v1600 = vunpack.c.l.b16 %v1536
        %v1601 = vunpack.c.l.b16 %v1537
        %v1602 = vunpack.c.l.b16 %v1538
        %v1603 = vunpack.c.l.b16 %v1539
        %v1604 = vunpack.c.l.b16 %v1540
        %v1605 = vpack.c.b16 %v1598, %v1597
        %v1606 = vpack.c.b16 %v1600, %v1599
        %v1607 = vpack.c.b16 %v1602, %v1601
        %v1608 = vpack.c.b16 %v1604, %v1603
        %v1610 = vsel %vm588, %v1605, 0
        %v1613 = vsel %vm588, %v1606, 0
        %v1616 = vsel %vm588, %v1607, 0
        %v1619 = vsel %vm588, %v1608, 0
        %1621 = vmatprep.subr.bf16.mxu0 0
        %1622 = vmatpush1.bf16.msra.mxu0 0
        %1623 = vmatprep.subr.bf16.mxu0 0
        %1624 = vmatpush1.bf16.msra.mxu0 0
        %1625 = vmatprep.subr.bf16.mxu0 0
        %1626 = vmatpush1.bf16.msra.mxu0 0
        %1627 = vmatprep.subr.bf16.mxu0 0
        %1628 = vmatpush1.bf16.msra.mxu0 0
        %1629 = vmatprep.subr.bf16.mxu0 %v1554
        %1630 = vmatpush1.bf16.msra.mxu0 %v1553
        %1631 = vmatprep.subr.bf16.mxu0 %v1550
        %1632 = vmatpush1.bf16.msra.mxu0 %v1549
        %1633 = vmatprep.subr.bf16.mxu0 %v1546
        %1634 = vmatpush1.bf16.msra.mxu0 %v1545
        %1635 = vmatprep.subr.bf16.mxu0 %v1542
        %1636 = vmatpush1.bf16.msra.mxu0 %v1541
        %1637 = vmatprep.subr.bf16.mxu0 0
        %1638 = vmatpush2.bf16.msra.mxu0 0
        %1639 = vmatprep.subr.bf16.mxu0 0
        %1640 = vmatpush2.bf16.msra.mxu0 0
        %1641 = vmatprep.subr.bf16.mxu0 0
        %1642 = vmatpush2.bf16.msra.mxu0 0
        %1643 = vmatprep.subr.bf16.mxu0 0
        %1644 = vmatpush2.bf16.msra.mxu0 0
        %1645 = vmatprep.subr.bf16.mxu0 0
        %1646 = vmatpush2.bf16.msra.mxu0 0
        %1647 = vmatprep.subr.bf16.mxu0 0
        %1648 = vmatpush2.bf16.msra.mxu0 0
        %1649 = vmatprep.subr.bf16.mxu0 0
        %1650 = vmatpush2.bf16.msra.mxu0 0
        %1651 = vmatprep.subr.bf16.mxu0 0
        %1652 = vmatpush2.bf16.msra.mxu0 0
        %1653 = vmatprep.mubr.bf16.mxu0 0
        %1654 = vmatmul.mubr.bf16.gmra.mxu0 %v1610
        %v1655 = vpop.f32.mrf.mxu0
        %v1656 = vadd.f32 %v1559, %v1655
        %v1657 = vpop.f32.mrf.mxu0
        %v1658 = vadd.f32 %v1559, %v1657
        %v1659 = vpop.f32.mrf.mxu0
        %v1660 = vadd.f32 %v1563, %v1659
        %v1661 = vpop.f32.mrf.mxu0
        %v1662 = vadd.f32 %v1563, %v1661
        %1663 = vmatprep.mubr.bf16.mxu0 0
        %1664 = vmatmul.mubr.bf16.gmra.mxu0 %v1613
        %v1665 = vpop.f32.mrf.mxu0
        %v1666 = vadd.f32 %v1567, %v1665
        %v1667 = vpop.f32.mrf.mxu0
        %v1668 = vadd.f32 %v1567, %v1667
        %v1669 = vpop.f32.mrf.mxu0
        %v1670 = vadd.f32 %v1571, %v1669
        %v1671 = vpop.f32.mrf.mxu0
        %v1672 = vadd.f32 %v1571, %v1671
        %1673 = vmatprep.mubr.bf16.mxu0 0
        %1674 = vmatmul.mubr.bf16.gmra.mxu0 %v1616
        %v1675 = vpop.f32.mrf.mxu0
        %v1676 = vadd.f32 %v1575, %v1675
        %v1677 = vpop.f32.mrf.mxu0
        %v1678 = vadd.f32 %v1575, %v1677
        %v1679 = vpop.f32.mrf.mxu0
        %v1680 = vadd.f32 %v1579, %v1679
        %v1681 = vpop.f32.mrf.mxu0
        %v1682 = vadd.f32 %v1579, %v1681
        %1683 = vmatprep.mubr.bf16.mxu0 0
        %1684 = vmatmul.mubr.bf16.gmra.mxu0 %v1619
        %v1685 = vpop.f32.mrf.mxu0
        %v1686 = vadd.f32 %v1583, %v1685
        %v1687 = vpop.f32.mrf.mxu0
        %v1688 = vadd.f32 %v1583, %v1687
        %v1689 = vpop.f32.mrf.mxu0
        %v1690 = vadd.f32 %v1587, %v1689
        %v1691 = vpop.f32.mrf.mxu0
        %v1692 = vadd.f32 %v1587, %v1691
        %1693 = vdwg.mxu0
        %1694 = vmatprep.subr.bf16.mxu0 0
        %1695 = vmatpush1.bf16.msra.mxu0 0
        %1696 = vmatprep.subr.bf16.mxu0 0
        %1697 = vmatpush1.bf16.msra.mxu0 0
        %1698 = vmatprep.subr.bf16.mxu0 0
        %1699 = vmatpush1.bf16.msra.mxu0 0
        %1700 = vmatprep.subr.bf16.mxu0 0
        %1701 = vmatpush1.bf16.msra.mxu0 0
        %1702 = vmatprep.subr.bf16.mxu0 %v1556
        %1703 = vmatpush1.bf16.msra.mxu0 %v1555
        %1704 = vmatprep.subr.bf16.mxu0 %v1552
        %1705 = vmatpush1.bf16.msra.mxu0 %v1551
        %1706 = vmatprep.subr.bf16.mxu0 %v1548
        %1707 = vmatpush1.bf16.msra.mxu0 %v1547
        %1708 = vmatprep.subr.bf16.mxu0 %v1544
        %1709 = vmatpush1.bf16.msra.mxu0 %v1543
        %1710 = vmatprep.subr.bf16.mxu0 0
        %1711 = vmatpush2.bf16.msra.mxu0 0
        %1712 = vmatprep.subr.bf16.mxu0 0
        %1713 = vmatpush2.bf16.msra.mxu0 0
        %1714 = vmatprep.subr.bf16.mxu0 0
        %1715 = vmatpush2.bf16.msra.mxu0 0
        %1716 = vmatprep.subr.bf16.mxu0 0
        %1717 = vmatpush2.bf16.msra.mxu0 0
        %1718 = vmatprep.subr.bf16.mxu0 0
        %1719 = vmatpush2.bf16.msra.mxu0 0
        %1720 = vmatprep.subr.bf16.mxu0 0
        %1721 = vmatpush2.bf16.msra.mxu0 0
        %1722 = vmatprep.subr.bf16.mxu0 0
        %1723 = vmatpush2.bf16.msra.mxu0 0
        %1724 = vmatprep.subr.bf16.mxu0 0
        %1725 = vmatpush2.bf16.msra.mxu0 0
        %1726 = vmatprep.mubr.bf16.mxu0 0
        %1727 = vmatmul.mubr.bf16.gmra.mxu0 %v1610
        %v1728 = vpop.f32.mrf.mxu0
        %v1729 = vadd.f32 %v1559, %v1728
        %v1730 = vpop.f32.mrf.mxu0
        %v1731 = vadd.f32 %v1559, %v1730
        %v1732 = vpop.f32.mrf.mxu0
        %v1733 = vadd.f32 %v1563, %v1732
        %v1734 = vpop.f32.mrf.mxu0
        %v1735 = vadd.f32 %v1563, %v1734
        %1736 = vmatprep.mubr.bf16.mxu0 0
        %1737 = vmatmul.mubr.bf16.gmra.mxu0 %v1613
        %v1738 = vpop.f32.mrf.mxu0
        %v1739 = vadd.f32 %v1567, %v1738
        %v1740 = vpop.f32.mrf.mxu0
        %v1741 = vadd.f32 %v1567, %v1740
        %v1742 = vpop.f32.mrf.mxu0
        %v1743 = vadd.f32 %v1571, %v1742
        %v1744 = vpop.f32.mrf.mxu0
        %v1745 = vadd.f32 %v1571, %v1744
        %1746 = vmatprep.mubr.bf16.mxu0 0
        %1747 = vmatmul.mubr.bf16.gmra.mxu0 %v1616
        %v1748 = vpop.f32.mrf.mxu0
        %v1749 = vadd.f32 %v1575, %v1748
        %v1750 = vpop.f32.mrf.mxu0
        %v1751 = vadd.f32 %v1575, %v1750
        %v1752 = vpop.f32.mrf.mxu0
        %v1753 = vadd.f32 %v1579, %v1752
        %v1754 = vpop.f32.mrf.mxu0
        %v1755 = vadd.f32 %v1579, %v1754
        %1756 = vmatprep.mubr.bf16.mxu0 0
        %1757 = vmatmul.mubr.bf16.gmra.mxu0 %v1619
        %v1758 = vpop.f32.mrf.mxu0
        %v1759 = vadd.f32 %v1583, %v1758
        %v1760 = vpop.f32.mrf.mxu0
        %v1761 = vadd.f32 %v1583, %v1760
        %v1762 = vpop.f32.mrf.mxu0
        %v1763 = vadd.f32 %v1587, %v1762
        %v1764 = vpop.f32.mrf.mxu0
        %v1765 = vadd.f32 %v1587, %v1764
        %1766 = vdwg.mxu0
        %v1767 = vmax.f32 %v1656, 0.0
        %v1768 = vmax.f32 %v1658, 0.0
        %v1769 = vmax.f32 %v1729, 0.0
        %v1770 = vmax.f32 %v1731, 0.0
        %v1771 = vmax.f32 %v1660, 0.0
        %v1772 = vmax.f32 %v1662, 0.0
        %v1773 = vmax.f32 %v1733, 0.0
        %v1774 = vmax.f32 %v1735, 0.0
        %v1775 = vmax.f32 %v1666, 0.0
        %v1776 = vmax.f32 %v1668, 0.0
        %v1777 = vmax.f32 %v1739, 0.0
        %v1778 = vmax.f32 %v1741, 0.0
        %v1779 = vmax.f32 %v1670, 0.0
        %v1780 = vmax.f32 %v1672, 0.0
        %v1781 = vmax.f32 %v1743, 0.0
        %v1782 = vmax.f32 %v1745, 0.0
        %v1783 = vmax.f32 %v1676, 0.0
        %v1784 = vmax.f32 %v1678, 0.0
        %v1785 = vmax.f32 %v1749, 0.0
        %v1786 = vmax.f32 %v1751, 0.0
        %v1787 = vmax.f32 %v1680, 0.0
        %v1788 = vmax.f32 %v1682, 0.0
        %v1789 = vmax.f32 %v1753, 0.0
        %v1790 = vmax.f32 %v1755, 0.0
        %v1791 = vmax.f32 %v1686, 0.0
        %v1792 = vmax.f32 %v1688, 0.0
        %v1793 = vmax.f32 %v1759, 0.0
        %v1794 = vmax.f32 %v1761, 0.0
        %v1795 = vmax.f32 %v1690, 0.0
        %v1796 = vmax.f32 %v1692, 0.0
        %v1797 = vmax.f32 %v1763, 0.0
        %v1798 = vmax.f32 %v1765, 0.0
        %s1799 = scalar_lea.vmem %s2, 128
        %v1800 = vld [vmem:[%s1799] sm:$0xf]
        %v1801 = vld [vmem:[%s1799 + $0x4] sm:$0xf]
        %v1802 = vld [vmem:[%s1799 + $0x8] sm:$0xf]
        %v1803 = vld [vmem:[%s1799 + $0xc] sm:$0xf]
        %v1804 = vld [vmem:[%s1799 + $0x10] sm:$0xf]
        %v1805 = vld [vmem:[%s1799 + $0x14] sm:$0xf]
        %v1806 = vld [vmem:[%s1799 + $0x18] sm:$0xf]
        %v1807 = vld [vmem:[%s1799 + $0x1c] sm:$0xf]
        %v1808 = vpack.c.bf16 %v1771, %v1767
        %v1809 = vpack.c.bf16 %v1772, %v1768
        %v1810 = vpack.c.bf16 %v1773, %v1769
        %v1811 = vpack.c.bf16 %v1774, %v1770
        %v1812 = vpack.c.bf16 %v1779, %v1775
        %v1813 = vpack.c.bf16 %v1780, %v1776
        %v1814 = vpack.c.bf16 %v1781, %v1777
        %v1815 = vpack.c.bf16 %v1782, %v1778
        %v1816 = vpack.c.bf16 %v1787, %v1783
        %v1817 = vpack.c.bf16 %v1788, %v1784
        %v1818 = vpack.c.bf16 %v1789, %v1785
        %v1819 = vpack.c.bf16 %v1790, %v1786
        %v1820 = vpack.c.bf16 %v1795, %v1791
        %v1821 = vpack.c.bf16 %v1796, %v1792
        %v1822 = vpack.c.bf16 %v1797, %v1793
        %v1823 = vpack.c.bf16 %v1798, %v1794
        %1824 = vset.pattern.permute.xlu0 5
        %1825 = vperm.xlu0 %1824, %v253
        %v1826 = vpop.permute.xlu0 %1825
        %1828 = vset.pattern.permute.xlu0 5
        %1829 = vperm.xlu0 %1828, %v254
        %v1830 = vpop.permute.xlu0 %1829
        %1832 = vset.pattern.permute.xlu0 5
        %1833 = vperm.xlu0 %1832, %v255
        %v1834 = vpop.permute.xlu0 %1833
        %1836 = vset.pattern.permute.xlu0 5
        %1837 = vperm.xlu0 %1836, %v256
        %v1838 = vpop.permute.xlu0 %1837
        %1840 = vset.pattern.permute.xlu0 5
        %1841 = vperm.xlu0 %1840, %v257
        %v1842 = vpop.permute.xlu0 %1841
        %1844 = vset.pattern.permute.xlu0 5
        %1845 = vperm.xlu0 %1844, %v258
        %v1846 = vpop.permute.xlu0 %1845
        %1848 = vset.pattern.permute.xlu0 5
        %1849 = vperm.xlu0 %1848, %v259
        %v1850 = vpop.permute.xlu0 %1849
        %1852 = vset.pattern.permute.xlu0 5
        %1853 = vperm.xlu0 %1852, %v260
        %v1854 = vpop.permute.xlu0 %1853
        %v1864 = vunpack.c.l.b16 %v1800
        %v1865 = vunpack.c.l.b16 %v1801
        %v1866 = vunpack.c.l.b16 %v1802
        %v1867 = vunpack.c.l.b16 %v1803
        %v1868 = vunpack.c.l.b16 %v1804
        %v1869 = vunpack.c.l.b16 %v1805
        %v1870 = vunpack.c.l.b16 %v1806
        %v1871 = vunpack.c.l.b16 %v1807
        %v1872 = vpack.c.b16 %v1865, %v1864
        %v1873 = vpack.c.b16 %v1867, %v1866
        %v1874 = vpack.c.b16 %v1869, %v1868
        %v1875 = vpack.c.b16 %v1871, %v1870
        %v1877 = vsel %vm588, %v1872, 0
        %v1880 = vsel %vm588, %v1873, 0
        %v1883 = vsel %vm588, %v1874, 0
        %v1886 = vsel %vm588, %v1875, 0
        %1888 = vmatprep.subr.bf16.mxu0 0
        %1889 = vmatpush1.bf16.msra.mxu0 0
        %1890 = vmatprep.subr.bf16.mxu0 0
        %1891 = vmatpush1.bf16.msra.mxu0 0
        %1892 = vmatprep.subr.bf16.mxu0 0
        %1893 = vmatpush1.bf16.msra.mxu0 0
        %1894 = vmatprep.subr.bf16.mxu0 0
        %1895 = vmatpush1.bf16.msra.mxu0 0
        %1896 = vmatprep.subr.bf16.mxu0 %v1821
        %1897 = vmatpush1.bf16.msra.mxu0 %v1820
        %1898 = vmatprep.subr.bf16.mxu0 %v1817
        %1899 = vmatpush1.bf16.msra.mxu0 %v1816
        %1900 = vmatprep.subr.bf16.mxu0 %v1813
        %1901 = vmatpush1.bf16.msra.mxu0 %v1812
        %1902 = vmatprep.subr.bf16.mxu0 %v1809
        %1903 = vmatpush1.bf16.msra.mxu0 %v1808
        %1904 = vmatprep.subr.bf16.mxu0 0
        %1905 = vmatpush2.bf16.msra.mxu0 0
        %1906 = vmatprep.subr.bf16.mxu0 0
        %1907 = vmatpush2.bf16.msra.mxu0 0
        %1908 = vmatprep.subr.bf16.mxu0 0
        %1909 = vmatpush2.bf16.msra.mxu0 0
        %1910 = vmatprep.subr.bf16.mxu0 0
        %1911 = vmatpush2.bf16.msra.mxu0 0
        %1912 = vmatprep.subr.bf16.mxu0 0
        %1913 = vmatpush2.bf16.msra.mxu0 0
        %1914 = vmatprep.subr.bf16.mxu0 0
        %1915 = vmatpush2.bf16.msra.mxu0 0
        %1916 = vmatprep.subr.bf16.mxu0 0
        %1917 = vmatpush2.bf16.msra.mxu0 0
        %1918 = vmatprep.subr.bf16.mxu0 0
        %1919 = vmatpush2.bf16.msra.mxu0 0
        %1920 = vmatprep.mubr.bf16.mxu0 0
        %1921 = vmatmul.mubr.bf16.gmra.mxu0 %v1877
        %v1922 = vpop.f32.mrf.mxu0
        %v1923 = vadd.f32 %v1826, %v1922
        %v1924 = vpop.f32.mrf.mxu0
        %v1925 = vadd.f32 %v1826, %v1924
        %v1926 = vpop.f32.mrf.mxu0
        %v1927 = vadd.f32 %v1830, %v1926
        %v1928 = vpop.f32.mrf.mxu0
        %v1929 = vadd.f32 %v1830, %v1928
        %1930 = vmatprep.mubr.bf16.mxu0 0
        %1931 = vmatmul.mubr.bf16.gmra.mxu0 %v1880
        %v1932 = vpop.f32.mrf.mxu0
        %v1933 = vadd.f32 %v1834, %v1932
        %v1934 = vpop.f32.mrf.mxu0
        %v1935 = vadd.f32 %v1834, %v1934
        %v1936 = vpop.f32.mrf.mxu0
        %v1937 = vadd.f32 %v1838, %v1936
        %v1938 = vpop.f32.mrf.mxu0
        %v1939 = vadd.f32 %v1838, %v1938
        %1940 = vmatprep.mubr.bf16.mxu0 0
        %1941 = vmatmul.mubr.bf16.gmra.mxu0 %v1883
        %v1942 = vpop.f32.mrf.mxu0
        %v1943 = vadd.f32 %v1842, %v1942
        %v1944 = vpop.f32.mrf.mxu0
        %v1945 = vadd.f32 %v1842, %v1944
        %v1946 = vpop.f32.mrf.mxu0
        %v1947 = vadd.f32 %v1846, %v1946
        %v1948 = vpop.f32.mrf.mxu0
        %v1949 = vadd.f32 %v1846, %v1948
        %1950 = vmatprep.mubr.bf16.mxu0 0
        %1951 = vmatmul.mubr.bf16.gmra.mxu0 %v1886
        %v1952 = vpop.f32.mrf.mxu0
        %v1953 = vadd.f32 %v1850, %v1952
        %v1954 = vpop.f32.mrf.mxu0
        %v1955 = vadd.f32 %v1850, %v1954
        %v1956 = vpop.f32.mrf.mxu0
        %v1957 = vadd.f32 %v1854, %v1956
        %v1958 = vpop.f32.mrf.mxu0
        %v1959 = vadd.f32 %v1854, %v1958
        %1960 = vdwg.mxu0
        %1961 = vmatprep.subr.bf16.mxu0 0
        %1962 = vmatpush1.bf16.msra.mxu0 0
        %1963 = vmatprep.subr.bf16.mxu0 0
        %1964 = vmatpush1.bf16.msra.mxu0 0
        %1965 = vmatprep.subr.bf16.mxu0 0
        %1966 = vmatpush1.bf16.msra.mxu0 0
        %1967 = vmatprep.subr.bf16.mxu0 0
        %1968 = vmatpush1.bf16.msra.mxu0 0
        %1969 = vmatprep.subr.bf16.mxu0 %v1823
        %1970 = vmatpush1.bf16.msra.mxu0 %v1822
        %1971 = vmatprep.subr.bf16.mxu0 %v1819
        %1972 = vmatpush1.bf16.msra.mxu0 %v1818
        %1973 = vmatprep.subr.bf16.mxu0 %v1815
        %1974 = vmatpush1.bf16.msra.mxu0 %v1814
        %1975 = vmatprep.subr.bf16.mxu0 %v1811
        %1976 = vmatpush1.bf16.msra.mxu0 %v1810
        %1977 = vmatprep.subr.bf16.mxu0 0
        %1978 = vmatpush2.bf16.msra.mxu0 0
        %1979 = vmatprep.subr.bf16.mxu0 0
        %1980 = vmatpush2.bf16.msra.mxu0 0
        %1981 = vmatprep.subr.bf16.mxu0 0
        %1982 = vmatpush2.bf16.msra.mxu0 0
        %1983 = vmatprep.subr.bf16.mxu0 0
        %1984 = vmatpush2.bf16.msra.mxu0 0
        %1985 = vmatprep.subr.bf16.mxu0 0
        %1986 = vmatpush2.bf16.msra.mxu0 0
        %1987 = vmatprep.subr.bf16.mxu0 0
        %1988 = vmatpush2.bf16.msra.mxu0 0
        %1989 = vmatprep.subr.bf16.mxu0 0
        %1990 = vmatpush2.bf16.msra.mxu0 0
        %1991 = vmatprep.subr.bf16.mxu0 0
        %1992 = vmatpush2.bf16.msra.mxu0 0
        %1993 = vmatprep.mubr.bf16.mxu0 0
        %1994 = vmatmul.mubr.bf16.gmra.mxu0 %v1877
        %v1995 = vpop.f32.mrf.mxu0
        %v1996 = vadd.f32 %v1826, %v1995
        %v1997 = vpop.f32.mrf.mxu0
        %v1998 = vadd.f32 %v1826, %v1997
        %v1999 = vpop.f32.mrf.mxu0
        %v2000 = vadd.f32 %v1830, %v1999
        %v2001 = vpop.f32.mrf.mxu0
        %v2002 = vadd.f32 %v1830, %v2001
        %2003 = vmatprep.mubr.bf16.mxu0 0
        %2004 = vmatmul.mubr.bf16.gmra.mxu0 %v1880
        %v2005 = vpop.f32.mrf.mxu0
        %v2006 = vadd.f32 %v1834, %v2005
        %v2007 = vpop.f32.mrf.mxu0
        %v2008 = vadd.f32 %v1834, %v2007
        %v2009 = vpop.f32.mrf.mxu0
        %v2010 = vadd.f32 %v1838, %v2009
        %v2011 = vpop.f32.mrf.mxu0
        %v2012 = vadd.f32 %v1838, %v2011
        %2013 = vmatprep.mubr.bf16.mxu0 0
        %2014 = vmatmul.mubr.bf16.gmra.mxu0 %v1883
        %v2015 = vpop.f32.mrf.mxu0
        %v2016 = vadd.f32 %v1842, %v2015
        %v2017 = vpop.f32.mrf.mxu0
        %v2018 = vadd.f32 %v1842, %v2017
        %v2019 = vpop.f32.mrf.mxu0
        %v2020 = vadd.f32 %v1846, %v2019
        %v2021 = vpop.f32.mrf.mxu0
        %v2022 = vadd.f32 %v1846, %v2021
        %2023 = vmatprep.mubr.bf16.mxu0 0
        %2024 = vmatmul.mubr.bf16.gmra.mxu0 %v1886
        %v2025 = vpop.f32.mrf.mxu0
        %v2026 = vadd.f32 %v1850, %v2025
        %v2027 = vpop.f32.mrf.mxu0
        %v2028 = vadd.f32 %v1850, %v2027
        %v2029 = vpop.f32.mrf.mxu0
        %v2030 = vadd.f32 %v1854, %v2029
        %v2031 = vpop.f32.mrf.mxu0
        %v2032 = vadd.f32 %v1854, %v2031
        %2033 = vdwg.mxu0
        %v2034 = vmax.f32 %v1923, 0.0
        %v2035 = vmax.f32 %v1925, 0.0
        %v2036 = vmax.f32 %v1996, 0.0
        %v2037 = vmax.f32 %v1998, 0.0
        %v2038 = vmax.f32 %v1927, 0.0
        %v2039 = vmax.f32 %v1929, 0.0
        %v2040 = vmax.f32 %v2000, 0.0
        %v2041 = vmax.f32 %v2002, 0.0
        %v2042 = vmax.f32 %v1933, 0.0
        %v2043 = vmax.f32 %v1935, 0.0
        %v2044 = vmax.f32 %v2006, 0.0
        %v2045 = vmax.f32 %v2008, 0.0
        %v2046 = vmax.f32 %v1937, 0.0
        %v2047 = vmax.f32 %v1939, 0.0
        %v2048 = vmax.f32 %v2010, 0.0
        %v2049 = vmax.f32 %v2012, 0.0
        %v2050 = vmax.f32 %v1943, 0.0
        %v2051 = vmax.f32 %v1945, 0.0
        %v2052 = vmax.f32 %v2016, 0.0
        %v2053 = vmax.f32 %v2018, 0.0
        %v2054 = vmax.f32 %v1947, 0.0
        %v2055 = vmax.f32 %v1949, 0.0
        %v2056 = vmax.f32 %v2020, 0.0
        %v2057 = vmax.f32 %v2022, 0.0
        %v2058 = vmax.f32 %v1953, 0.0
        %v2059 = vmax.f32 %v1955, 0.0
        %v2060 = vmax.f32 %v2026, 0.0
        %v2061 = vmax.f32 %v2028, 0.0
        %v2062 = vmax.f32 %v1957, 0.0
        %v2063 = vmax.f32 %v1959, 0.0
        %v2064 = vmax.f32 %v2030, 0.0
        %v2065 = vmax.f32 %v2032, 0.0
        %v2066 = vld [vmem:[%s3] sm:$0x1]
        %2067 = vset.pattern.permute.xlu0 7
        %2068 = vperm.xlu0 %2067, %v253
        %v2069 = vpop.permute.xlu0 %2068
        %2071 = vset.pattern.permute.xlu0 7
        %2072 = vperm.xlu0 %2071, %v254
        %v2073 = vpop.permute.xlu0 %2072
        %2075 = vset.pattern.permute.xlu0 7
        %2076 = vperm.xlu0 %2075, %v255
        %v2077 = vpop.permute.xlu0 %2076
        %2079 = vset.pattern.permute.xlu0 7
        %2080 = vperm.xlu0 %2079, %v256
        %v2081 = vpop.permute.xlu0 %2080
        %2083 = vset.pattern.permute.xlu0 7
        %2084 = vperm.xlu0 %2083, %v257
        %v2085 = vpop.permute.xlu0 %2084
        %2087 = vset.pattern.permute.xlu0 7
        %2088 = vperm.xlu0 %2087, %v258
        %v2089 = vpop.permute.xlu0 %2088
        %2091 = vset.pattern.permute.xlu0 7
        %2092 = vperm.xlu0 %2091, %v259
        %v2093 = vpop.permute.xlu0 %2092
        %2095 = vset.pattern.permute.xlu0 7
        %2096 = vperm.xlu0 %2095, %v260
        %v2097 = vpop.permute.xlu0 %2096
        %v2099 = vmul.f32 %v2069, %v2034
        %v2100 = vmul.f32 %v2069, %v2035
        %v2101 = vmul.f32 %v2069, %v2036
        %v2102 = vmul.f32 %v2069, %v2037
        %v2103 = vmul.f32 %v2073, %v2038
        %v2104 = vmul.f32 %v2073, %v2039
        %v2105 = vmul.f32 %v2073, %v2040
        %v2106 = vmul.f32 %v2073, %v2041
        %v2107 = vmul.f32 %v2077, %v2042
        %v2108 = vmul.f32 %v2077, %v2043
        %v2109 = vmul.f32 %v2077, %v2044
        %v2110 = vmul.f32 %v2077, %v2045
        %v2111 = vmul.f32 %v2081, %v2046
        %v2112 = vmul.f32 %v2081, %v2047
        %v2113 = vmul.f32 %v2081, %v2048
        %v2114 = vmul.f32 %v2081, %v2049
        %v2115 = vmul.f32 %v2085, %v2050
        %v2116 = vmul.f32 %v2085, %v2051
        %v2117 = vmul.f32 %v2085, %v2052
        %v2118 = vmul.f32 %v2085, %v2053
        %v2119 = vmul.f32 %v2089, %v2054
        %v2120 = vmul.f32 %v2089, %v2055
        %v2121 = vmul.f32 %v2089, %v2056
        %v2122 = vmul.f32 %v2089, %v2057
        %v2123 = vmul.f32 %v2093, %v2058
        %v2124 = vmul.f32 %v2093, %v2059
        %v2125 = vmul.f32 %v2093, %v2060
        %v2126 = vmul.f32 %v2093, %v2061
        %v2127 = vmul.f32 %v2097, %v2062
        %v2128 = vmul.f32 %v2097, %v2063
        %v2129 = vmul.f32 %v2097, %v2064
        %v2130 = vmul.f32 %v2097, %v2065
        %v2131 = vadd.f32 %v2099, %v2103
        %v2132 = vadd.f32 %v2131, %v2107
        %v2133 = vadd.f32 %v2132, %v2111
        %v2134 = vadd.f32 %v2133, %v2115
        %v2135 = vadd.f32 %v2134, %v2119
        %v2136 = vadd.f32 %v2135, %v2123
        %v2137 = vadd.f32 %v2136, %v2127
        %v2138 = vrot.slane %v2137, 4
        %v2139 = vadd.f32 %v2137, %v2138
        %v2140 = vrot.slane %v2139, 2
        %v2141 = vadd.f32 %v2139, %v2140
        %v2142 = vrot.slane %v2141, 1
        %v2143 = vadd.f32 %v2141, %v2142
        %v2144 = vadd.f32 %v2100, %v2104
        %v2145 = vadd.f32 %v2144, %v2108
        %v2146 = vadd.f32 %v2145, %v2112
        %v2147 = vadd.f32 %v2146, %v2116
        %v2148 = vadd.f32 %v2147, %v2120
        %v2149 = vadd.f32 %v2148, %v2124
        %v2150 = vadd.f32 %v2149, %v2128
        %v2151 = vrot.slane %v2150, 4
        %v2152 = vadd.f32 %v2150, %v2151
        %v2153 = vrot.slane %v2152, 2
        %v2154 = vadd.f32 %v2152, %v2153
        %v2155 = vrot.slane %v2154, 1
        %v2156 = vadd.f32 %v2154, %v2155
        %v2157 = vadd.f32 %v2101, %v2105
        %v2158 = vadd.f32 %v2157, %v2109
        %v2159 = vadd.f32 %v2158, %v2113
        %v2160 = vadd.f32 %v2159, %v2117
        %v2161 = vadd.f32 %v2160, %v2121
        %v2162 = vadd.f32 %v2161, %v2125
        %v2163 = vadd.f32 %v2162, %v2129
        %v2164 = vrot.slane %v2163, 4
        %v2165 = vadd.f32 %v2163, %v2164
        %v2166 = vrot.slane %v2165, 2
        %v2167 = vadd.f32 %v2165, %v2166
        %v2168 = vrot.slane %v2167, 1
        %v2169 = vadd.f32 %v2167, %v2168
        %v2170 = vadd.f32 %v2102, %v2106
        %v2171 = vadd.f32 %v2170, %v2110
        %v2172 = vadd.f32 %v2171, %v2114
        %v2173 = vadd.f32 %v2172, %v2118
        %v2174 = vadd.f32 %v2173, %v2122
        %v2175 = vadd.f32 %v2174, %v2126
        %v2176 = vadd.f32 %v2175, %v2130
        %v2177 = vrot.slane %v2176, 4
        %v2178 = vadd.f32 %v2176, %v2177
        %v2179 = vrot.slane %v2178, 2
        %v2180 = vadd.f32 %v2178, %v2179
        %v2181 = vrot.slane %v2180, 1
        %v2182 = vadd.f32 %v2180, %v2181
        %2184 = vset.pattern.permute.xlu0 6
        %2185 = vperm.xlu0 %2184, %v2066
        %v2186 = vpop.permute.xlu0 %2185
        %v2188 = vadd.f32 %v2143, %v2186
        %v2189 = vadd.f32 %v2156, %v2186
        %v2190 = vadd.f32 %v2169, %v2186
        %v2191 = vadd.f32 %v2182, %v2186
        %v2196 = vcombine.low %v2188, %v2189
        %v2197 = vcombine.low %v2190, %v2191
        %v2199 = vunpack.c.l.s4 1966171168
        %v2200 = vunpack.c.0.s8 %v2199
        %v2201 = vlaneseq
        %v2202 = vshrl.u32 %v2201, 7
        %v2203 = vsub.s32 %v2200, %v2202
        %v2204 = vrot.slane %v2196, %v2203
        %v2206 = vunpack.c.l.s4 1966171168
        %v2207 = vunpack.c.0.s8 %v2206
        %v2208 = vlaneseq
        %v2209 = vshrl.u32 %v2208, 7
        %v2210 = vsub.s32 %v2207, %v2209
        %v2211 = vrot.slane %v2197, %v2210
        %v2212 = vcombine.low %v2204, %v2211
        %v2214 = vunpack.c.l.s4 1966171168
        %v2215 = vunpack.c.0.s8 %v2214
        %v2216 = vlaneseq
        %v2217 = vshrl.u32 %v2216, 7
        %v2218 = vsub.s32 %v2215, %v2217
        %v2219 = vrot.slane %v2212, %v2218
        %v2221 = vlaneseq
        %vm2222 = vcmp.ge.s32.totalorder %v2221, 0
        %vm2223 = vcmp.lt.s32.totalorder %v2221, 512
        %vm2224 = vmand %vm2222, %vm2223
        %2225 = vst.msk [vmem:[%s230] sm:$0xf] %vm2224, %v2219
        %s2226 = smul.u32 4, %s15
        %p2227 = scmp.lt.s32.totalorder %s2226, 7
        %s2228 = scalar_select %p2227, %s2226, 7
        %s2229 = scalar_lea.vmem %s4, %s2228
        // Predicated region
        $region60: #{sdf_forward.1} parent=54 // pred_check
          %p2230 = pneg %p122
        $region61: #{sdf_forward.1} parent=54 // pred_check_branch
          %2232 = sbr.rel (%p2230) target = $region63
        $region62: #{sdf_forward.1} parent=54 // pred_region
          %s2233 = smul.u32 4, %s15
        $region63: #{sdf_forward.1} parent=54 // pred_fallthru
          _
      $region55: #{sdf_forward.1} parent=5 // pred_fallthru
        _
      %p2234 = scmp.le.s32.totalorder 2, %s10
      // Predicated region
      $region64: #{sdf_forward.1} parent=5 // pred_check
        %p2235 = pneg %p2234
      $region65: #{sdf_forward.1} parent=5 // pred_check_branch
        %2237 = sbr.rel (%p2235) target = $region67
      $region66: #{sdf_forward.1} parent=5 // pred_region
        %s2238 = ssub.s32 %s10, 2
        // Predicated region
        $region68: #{sdf_forward.1} parent=66 // pred_check
          %p2239 = pneg %p128
        $region69: #{sdf_forward.1} parent=66 // pred_check_branch
          %2241 = sbr.rel (%p2239) target = $region71
        $region70: #{sdf_forward.1} parent=66 // pred_region
          %s2242 = smul.u32 4, %s16
          %p2243 = scmp.lt.s32.totalorder %s2242, 7
          %s2244 = scalar_select %p2243, %s2242, 7
          %s2245 = scalar_lea.vmem %s4, %s2244
        $region71: #{sdf_forward.1} parent=66 // pred_fallthru
          _
      $region67: #{sdf_forward.1} parent=5 // pred_fallthru
        _
    $region6: #{sdf_forward.1} parent=1 // loop_footer
      %s14 = sadd.s32 1, %s10
    $region7: #{sdf_forward.1} parent=1 // loop_footer_branch
      %9 = sbr.rel target = $region3
    $region8: #{sdf_forward.1} parent=1 // loop_exit
      _

</llo_original>
